<compile_context>
chip_gen: v7x
topology: tpu7x:2x2x1
jax: 0.10.0
libtpu: 0.0.40
codegen_flags: <defaults>
</compile_context>

<pallas_src>
import numpy as np
import jax
import jax.numpy as jnp
from jax import lax
from jax.experimental import pallas as pl
from jax.experimental.pallas import tpu as pltpu

# ----- model sizes (small, consistent with the module's __init__) -------------
E = 32                     # emb_dim
VOCAB_DIAG = 30            # vocab_size[0]
VOCAB_PROC = 25            # vocab_size[1]
V = 64                     # vocab_size[2]  (medications)
S = 16                     # ddi_mask_H.shape[1]  (substructures)
T = 4                      # admissions per patient
N_DIAG_CODES = 3
N_PROC_CODES = 2
B = 16                     # patients per call (single kernel invocation)

E2 = 2 * E                 # 64  (joint GRU state width [h1 | h2])
E6 = 6 * E                 # 192 (both GRUs x 3 gates)
HS = V + S                 # 80  (fused head output width)
LANES = 128
PROC_OFFSET = 64           # proc codes mapped to lanes [64, 64+VOCAB_PROC)

# gru_blob rows (width E6 = 192), bf16
G_WF = 0                   # folded (multi-hot counts -> gate preact) weights, 128 rows
G_WH = LANES               # hidden -> gates weights, 64 rows
G_BI = G_WH + E2           # folded biases (r/z: bi+bh, n: bi only)
G_BHN = G_BI + 1           # hidden bias of the n gate (cols 128:192)
GB_ROWS = G_BHN + 1        # 194

# head_blob rows (width 128, lane dense), bf16
R_BQ, R_HBB, R_CB, R_LNG, R_LNB = 0, 1, 2, 3, 4
R_WQ = 8                   # query Linear weight slab (2E rows, cols 0:E)
R_HW = R_WQ + E2           # 72   [MPNN_emb.T | Wbt.T] slab (128 rows, rows 0:E used)
R_WC = R_HW + LANES        # 200  combined MPNN_output / masked bipartite_output slab
R_ADJ = R_WC + LANES       # 328  ddi_adj slab (V rows, cols 0:V)
HB_ROWS = R_ADJ + V        # 392

OUT_W = 128                # lane-dense packed output width


# ----------------------------- Pallas kernel ---------------------------------
def safedrug_kernel(diag_ref, proc_ref, gw_ref, hw_ref, out_ref):
    Tn, Bn, ND = diag_ref.shape
    NP = proc_ref.shape[2]

    # ---- weights: full-width row-range reads only (no sub-128 column loads) --
    wfold = gw_ref[G_WF:G_WF + LANES, :]          # (128, 192) counts -> gate preacts
    wh = gw_ref[G_WH:G_WH + E2, :]                # (64, 192)  hidden -> gates
    bi = gw_ref[G_BI:G_BI + 1, :]                 # (1, 192)   folded biases
    bhn = gw_ref[G_BHN:G_BHN + 1, :]              # (1, 192)   n-gate hidden bias (cols 128:)

    bq = hw_ref[R_BQ:R_BQ + 1, :]                 # (1, 128)
    headb = hw_ref[R_HBB:R_HBB + 1, :]            # (1, 128)
    combb = hw_ref[R_CB:R_CB + 1, :]              # (1, 128)
    lng = hw_ref[R_LNG:R_LNG + 1, :]              # (1, 128)
    lnb = hw_ref[R_LNB:R_LNB + 1, :]              # (1, 128)
    wq_s = hw_ref[R_WQ:R_WQ + E2, :]              # (64, 128)
    hw_s = hw_ref[R_HW:R_HW + LANES, :]           # (128, 128)
    wc_s = hw_ref[R_WC:R_WC + LANES, :]           # (128, 128)
    adj_s = hw_ref[R_ADJ:R_ADJ + V, :]            # (64, 128)

    # ---- in-kernel sum-embedding: raw code ids -> multi-hot count matrix ----
    # TODO(synk): nn.Dropout(p=0.5) treated as eval-mode identity (deterministic kernel).
    lane_iota = lax.broadcasted_iota(jnp.int32, (Bn, LANES), 1)
    cnt_list = []
    for t in range(Tn):                            # static unroll (T=4)
        dt = diag_ref[t]                           # (B, ND) int32
        pt = proc_ref[t]                           # (B, NP) int32
        cnt = jnp.zeros((Bn, LANES), jnp.float32)
        for c in range(ND):
            cnt += (dt[:, c:c + 1] == lane_iota).astype(jnp.float32)
        for c in range(NP):
            cnt += ((pt[:, c:c + 1] + PROC_OFFSET) == lane_iota).astype(jnp.float32)
        cnt_list.append(cnt)
    counts = jnp.concatenate(cnt_list, axis=0).astype(jnp.bfloat16)   # (T*B, 128) time-major

    # gate preactivations for ALL steps and BOTH GRUs in one bf16 matmul
    # (embedding tables are pre-folded into wfold at pack time)
    gi = jnp.dot(counts, wfold, preferred_element_type=jnp.float32) + bi   # (T*B, 192)

    # ---- interleaved GRU pair over state [h1 | h2], gates [r1 r2|z1 z2|n1 n2] ----
    h = jnp.zeros((Bn, E2), jnp.float32)
    for t in range(Tn):                            # static unroll
        g = gi[t * Bn:(t + 1) * Bn, :]             # (B, 192)
        if t == 0:
            gh = jnp.zeros((Bn, E6), jnp.float32)
        else:
            gh = jnp.dot(h.astype(jnp.bfloat16), wh,
                         preferred_element_type=jnp.float32)          # (B, 192)
        rz = jax.nn.sigmoid(g[:, :2 * E2] + gh[:, :2 * E2])           # (B, 128)
        r, z = rz[:, :E2], rz[:, E2:]
        n = jnp.tanh(g[:, 2 * E2:] + r * (gh[:, 2 * E2:] + bhn[:, 2 * E2:]))
        h = (1.0 - z) * n + z * h

    # query = Linear(ReLU(cat[h1, h2]))  (lane-padded to 128 cols, padding is 0)
    q = jnp.dot(jax.nn.relu(h).astype(jnp.bfloat16), wq_s,
                preferred_element_type=jnp.float32) + bq              # (B, 128)

    # fused head: one matmul + one sigmoid -> [MPNN_match | tfeat | 0.5-padding]
    sig = jax.nn.sigmoid(
        jnp.dot(q.astype(jnp.bfloat16), hw_s,
                preferred_element_type=jnp.float32) + headb)          # (B, 128)

    # combined slab: cols 0:V = match @ MPNN_output + bias, cols V: = bipartite emb
    comb = jnp.dot(sig.astype(jnp.bfloat16), wc_s,
                   preferred_element_type=jnp.float32) + combb        # (B, 128)

    # MPNN attention branch: LayerNorm over exactly V=64 columns
    xln = sig[:, :V] + comb[:, :V]                                    # (B, 64)
    mu = jnp.mean(xln, axis=-1, keepdims=True)
    var = jnp.mean((xln - mu) ** 2, axis=-1, keepdims=True)
    att = (xln - mu) * lax.rsqrt(var + 1e-5) * lng[:, :V] + lnb[:, :V]

    result = comb[:, V:] * att                                        # (B, 64)

    # batch_neg per sample: 0.0005 * sum_ij npp_i npp_j adj_ij
    npp = jax.nn.sigmoid(result)
    dd = jnp.dot(npp.astype(jnp.bfloat16), adj_s,
                 preferred_element_type=jnp.float32)                  # (B, 128), cols V: == 0
    neg = 0.0005 * jnp.sum(dd[:, :V] * npp, axis=-1, keepdims=True)   # (B, 1)

    # lane-dense packed output: [result | broadcast(neg)] -> single full store
    out_ref[...] = jnp.concatenate(
        [result, jnp.broadcast_to(neg, (Bn, OUT_W - V))], axis=-1)


# ------------------------------ wrapper / glue --------------------------------
def build_mpnn_emb(key):
    """__init__-time MolecularGraphNeuralNetwork forward + average_projection.
    Pure-JAX glue (runs once at parameter construction, not in the hot path)."""
    n_fp = 20
    mol_sizes = [4, 3, 5]
    n_atoms = sum(mol_sizes)
    n_mols = len(mol_sizes)
    k1, k2, k3, k4, k5 = jax.random.split(key, 5)

    fps = jax.random.randint(k1, (n_atoms,), 0, n_fp)
    embed = jax.random.normal(k2, (n_fp, E), jnp.float32)
    s = 1.0 / np.sqrt(E)
    wkeys = jax.random.split(k3, 2)
    bkeys = jax.random.split(k4, 2)
    Ws = [jax.random.uniform(wkeys[i], (E, E), jnp.float32, -s, s) for i in range(2)]
    bs = [jax.random.uniform(bkeys[i], (E,), jnp.float32, -s, s) for i in range(2)]

    adj_np = np.zeros((n_atoms, n_atoms), np.float32)
    rng = np.random.RandomState(0)
    off = 0
    for m in mol_sizes:
        a = (rng.rand(m, m) < 0.5).astype(np.float32)
        a = np.maximum(a, a.T)
        np.fill_diagonal(a, 0.0)
        adj_np[off:off + m, off:off + m] = a
        off += m
    adj = jnp.asarray(adj_np)

    v = embed[fps]
    for l in range(2):                                   # layer_hidden = 2
        hh = jax.nn.relu(v @ Ws[l] + bs[l])
        v = hh + adj @ hh
    seg = jnp.asarray(np.repeat(np.arange(n_mols), mol_sizes))
    mol_vecs = jax.ops.segment_sum(v, seg, num_segments=n_mols)
    proj = jax.random.uniform(k5, (V, n_mols))
    proj = proj / proj.sum(axis=1, keepdims=True)
    return proj @ mol_vecs                               # (V, E)


def pack_params(p):
    """Fold / stack the raw per-layer weights into two bf16 VMEM-friendly blobs."""
    # --- block-diagonal gate-stacked GRU weights, gate order [r|z|n], each
    #     gate block laid out [GRU1 cols | GRU2 cols] ---
    wi_cat = jnp.zeros((E2, E6), jnp.float32)
    wh_cat = jnp.zeros((E2, E6), jnp.float32)
    for g in range(3):                                   # r, z, n
        c = 2 * g * E
        wi_cat = wi_cat.at[0:E, c:c + E].set(p['g1_wi'][g])
        wi_cat = wi_cat.at[E:E2, c + E:c + 2 * E].set(p['g2_wi'][g])
        wh_cat = wh_cat.at[0:E, c:c + E].set(p['g1_wh'][g])
        wh_cat = wh_cat.at[E:E2, c + E:c + 2 * E].set(p['g2_wh'][g])
    # folded biases: (bi+bh) for r and z; bi only for n (bh_n stays separate
    # because of the r * (h@Wh_n + bh_n) term)
    bi_cat = jnp.concatenate([
        p['g1_bi'][0] + p['g1_bh'][0], p['g2_bi'][0] + p['g2_bh'][0],
        p['g1_bi'][1] + p['g1_bh'][1], p['g2_bi'][1] + p['g2_bh'][1],
        p['g1_bi'][2],                  p['g2_bi'][2]], axis=-1)        # (1, 192)
    bhn_row = jnp.zeros((1, E6), jnp.float32)
    bhn_row = bhn_row.at[:, 4 * E:5 * E].set(p['g1_bh'][2][0])
    bhn_row = bhn_row.at[:, 5 * E:6 * E].set(p['g2_bh'][2][0])

    # combined sum-embedding table folded through the GRU input projections:
    # counts @ (emb_comb @ wi_cat) == [i1|i2] @ wi_cat
    emb_comb = jnp.zeros((LANES, E2), jnp.float32)
    emb_comb = emb_comb.at[0:VOCAB_DIAG, 0:E].set(p['E0'])
    emb_comb = emb_comb.at[PROC_OFFSET:PROC_OFFSET + VOCAB_PROC, E:E2].set(p['E1'])
    wfold = emb_comb @ wi_cat                                            # (128, 192)

    gru_blob = jnp.concatenate([wfold, wh_cat, bi_cat, bhn_row],
                               axis=0).astype(jnp.bfloat16)              # (194, 192)

    # --- head blob: every weight a 128-lane-dense slab, zero padded ---
    wq_cat = jnp.concatenate([p['wq'][0], p['wq'][1]], axis=0)           # (2E, E)
    hb = jnp.zeros((HB_ROWS, LANES), jnp.float32)
    hb = hb.at[R_BQ, 0:E].set(p['bq'][0])
    hb = hb.at[R_HBB, V:HS].set(p['bbt'][0])
    hb = hb.at[R_CB, 0:V].set(p['bmo'][0])
    hb = hb.at[R_LNG, 0:V].set(p['ln_g'][0])
    hb = hb.at[R_LNB, 0:V].set(p['ln_b'][0])
    hb = hb.at[R_WQ:R_WQ + E2, 0:E].set(wq_cat)
    hb = hb.at[R_HW:R_HW + E, 0:V].set(p['mpnn_emb_t'])                  # MPNN_emb.T
    hb = hb.at[R_HW:R_HW + E, V:HS].set(p['wbt_t'])                      # bipartite_transform
    hb = hb.at[R_WC:R_WC + V, 0:V].set(p['wmo_t'])                       # MPNN_output
    hb = hb.at[R_WC + V:R_WC + HS, V:2 * V].set(p['wbo'] * p['mask_t'])  # masked MaskLinear
    hb = hb.at[R_ADJ:R_ADJ + V, 0:V].set(p['adj'])
    head_blob = hb.astype(jnp.bfloat16)                                  # (392, 128)
    return gru_blob, head_blob


def init_params(key):
    keys = iter(jax.random.split(key, 40))

    def q16(x):   # store weights at bf16 precision (the kernel's operand dtype)
        return jnp.asarray(x, jnp.bfloat16).astype(jnp.float32)

    def u(shape, scale):
        return q16(jax.random.uniform(next(keys), shape, jnp.float32, -scale, scale))

    p = {}
    # embeddings: init_weights() -> uniform(-0.1, 0.1)
    p['E0'] = u((VOCAB_DIAG, E), 0.1)
    p['E1'] = u((VOCAB_PROC, E), 0.1)

    # GRU encoders (PyTorch default U(-1/sqrt(H), 1/sqrt(H))), pre-transposed,
    # gate-stacked [reset, update, new]
    sg = 1.0 / np.sqrt(E)
    for i in (1, 2):
        p[f'g{i}_wi'] = u((3, E, E), sg)
        p[f'g{i}_wh'] = u((3, E, E), sg)
        p[f'g{i}_bi'] = u((3, 1, E), sg)
        p[f'g{i}_bh'] = u((3, 1, E), sg)

    # query: Sequential(ReLU, Linear(2E -> E)); weight split per half of the concat
    sq = 1.0 / np.sqrt(2 * E)
    p['wq'] = u((2, E, E), sq)
    p['bq'] = u((1, E), sq)

    # bipartite_transform: Linear(E -> S)
    sbt = 1.0 / np.sqrt(E)
    p['wbt_t'] = u((E, S), sbt)
    p['bbt'] = u((1, S), sbt)

    # bipartite_output: MaskLinear(S -> V, bias=False), U(-1/sqrt(V), 1/sqrt(V))
    p['wbo'] = u((S, V), 1.0 / np.sqrt(V))

    # MPNN_output: Linear(V -> V)
    smo = 1.0 / np.sqrt(V)
    p['wmo_t'] = u((V, V), smo)
    p['bmo'] = u((1, V), smo)

    # MPNN_layernorm(V)
    p['ln_g'] = jnp.ones((1, V), jnp.float32)
    p['ln_b'] = jnp.zeros((1, V), jnp.float32)

    # ddi_mask_H (V, S) and ddi_adj (V, V)  (0/1, exact in bf16)
    mask = (jax.random.uniform(next(keys), (V, S)) < 0.3).astype(jnp.float32)
    p['mask_t'] = mask.T                                   # ddi_mask_H.t()
    a = (jax.random.uniform(next(keys), (V, V)) < 0.1).astype(jnp.float32)
    p['adj'] = jnp.maximum(a, a.T) * (1.0 - jnp.eye(V, dtype=jnp.float32))

    # MPNN_emb = average_projection @ MPNN(...)  (computed in __init__)
    p['mpnn_emb_t'] = q16(build_mpnn_emb(next(keys)).T)    # (E, V)

    # packed kernel-side blobs (bf16)
    p['gru_blob'], p['head_blob'] = pack_params(p)
    return p


@jax.jit
def safedrug_forward(params, visits_diag, visits_proc):
    """Batched forward over B patients; visits_* are (T, B, n_codes) int32.
    Equivalent to calling the PyTorch module once per patient (eval mode).
    All preprocessing (sum-embedding etc.) happens inside the kernel."""
    Tn, Bn, ND = visits_diag.shape
    NP = visits_proc.shape[2]

    out = pl.pallas_call(
        safedrug_kernel,
        out_shape=jax.ShapeDtypeStruct((Bn, OUT_W), jnp.float32),
        grid=(1,),                                        # whole batch in one step
        in_specs=[
            pl.BlockSpec((Tn, Bn, ND), lambda i: (0, 0, 0)),
            pl.BlockSpec((Tn, Bn, NP), lambda i: (0, 0, 0)),
            pl.BlockSpec((GB_ROWS, E6), lambda i: (0, 0)),
            pl.BlockSpec((HB_ROWS, LANES), lambda i: (0, 0)),
        ],
        out_specs=pl.BlockSpec((Bn, OUT_W), lambda i: (0, 0)),
        compiler_params=pltpu.CompilerParams(
            dimension_semantics=("arbitrary",)),          # 1 step: no megacore split
    )(visits_diag, visits_proc, params['gru_blob'], params['head_blob'])

    return out[:, :V], out[:, V]                          # (B, V), (B,)


# --------------------------- pure-JAX reference --------------------------------
def reference_forward(params, visits_diag, visits_proc):
    Tn, Bn = visits_diag.shape[0], visits_diag.shape[1]
    results, negs = [], []
    for b in range(Bn):
        i1 = params['E0'][visits_diag[:, b]].sum(axis=1)   # (T, E)
        i2 = params['E1'][visits_proc[:, b]].sum(axis=1)

        def gru(x, wi, wh, bi, bh):
            h = jnp.zeros((1, E), jnp.float32)
            for t in range(x.shape[0]):
                xt = x[t:t + 1]
                r = jax.nn.sigmoid(xt @ wi[0] + bi[0] + h @ wh[0] + bh[0])
                z = jax.nn.sigmoid(xt @ wi[1] + bi[1] + h @ wh[1] + bh[1])
                n = jnp.tanh(xt @ wi[2] + bi[2] + r * (h @ wh[2] + bh[2]))
                h = (1.0 - z) * n + z * h
            return h

        h1 = gru(i1, params['g1_wi'], params['g1_wh'], params['g1_bi'], params['g1_bh'])
        h2 = gru(i2, params['g2_wi'], params['g2_wh'], params['g2_bi'], params['g2_bh'])
        q = (jax.nn.relu(h1) @ params['wq'][0] + jax.nn.relu(h2) @ params['wq'][1]
             + params['bq'])
        match = jax.nn.sigmoid(q @ params['mpnn_emb_t'])
        x = match + (match @ params['wmo_t'] + params['bmo'])
        mu = x.mean(-1, keepdims=True)
        var = ((x - mu) ** 2).mean(-1, keepdims=True)
        att = (x - mu) / jnp.sqrt(var + 1e-5) * params['ln_g'] + params['ln_b']
        tfeat = jax.nn.sigmoid(q @ params['wbt_t'] + params['bbt'])
        bip = tfeat @ (params['wbo'] * params['mask_t'])
        result = bip * att
        npp = jax.nn.sigmoid(result)
        neg = 0.0005 * jnp.sum((npp.T * npp) * params['adj'])
        results.append(result)
        negs.append(neg)
    return jnp.concatenate(results, axis=0), jnp.stack(negs)


# ----------------------------------- main --------------------------------------
if __name__ == "__main__":
    key = jax.random.PRNGKey(0)
    k_par, k_d, k_p = jax.random.split(key, 3)

    params = init_params(k_par)
    # admissions-major layout (T, B, n_codes): matches the module's per-admission loop
    visits_diag = jax.random.randint(k_d, (T, B, N_DIAG_CODES), 0, VOCAB_DIAG)
    visits_proc = jax.random.randint(k_p, (T, B, N_PROC_CODES), 0, VOCAB_PROC)

    result, batch_neg = safedrug_forward(params, visits_diag, visits_proc)
    jax.block_until_ready(result)
    jax.block_until_ready(batch_neg)

    ref_result, ref_neg = reference_forward(params, visits_diag, visits_proc)
    assert result.shape == (B, V)
    assert batch_neg.shape == (B,)
    # tolerances account for bf16 matmul operands (f32 accumulation) in the kernel
    assert np.allclose(np.asarray(result), np.asarray(ref_result), atol=2e-2, rtol=2e-2)
    assert np.allclose(np.asarray(batch_neg), np.asarray(ref_neg), atol=2e-3, rtol=2e-2)

    print("KERNEL_OK")
</pallas_src>

<mosaic_0001>
module attributes {stable_mosaic.version = 11 : i64} {
  func.func @safedrug_kernel(%arg0: i32, %arg1: memref<4x16x3xi32, #tpu.memory_space<vmem>>, %arg2: memref<4x16x2xi32, #tpu.memory_space<vmem>>, %arg3: memref<194x192xbf16, #tpu.memory_space<vmem>>, %arg4: memref<392x128xbf16, #tpu.memory_space<vmem>>, %arg5: memref<16x128xf32, #tpu.memory_space<vmem>>) attributes {dimension_semantics = [#tpu.dimension_semantics<arbitrary>], iteration_bounds = array<i64: 1>, scalar_prefetch = 0 : i64, scratch_operands = 0 : i64, tpu.core_type = #tpu.core_type<tc>, window_params = [{pipeline_mode = #tpu.pipeline_mode<synchronous>, transform_indices = @transform_0, window_bounds = array<i64: 4, 16, 3>}, {pipeline_mode = #tpu.pipeline_mode<synchronous>, transform_indices = @transform_1, window_bounds = array<i64: 4, 16, 2>}, {pipeline_mode = #tpu.pipeline_mode<synchronous>, transform_indices = @transform_2, window_bounds = array<i64: 194, 192>}, {pipeline_mode = #tpu.pipeline_mode<synchronous>, transform_indices = @transform_3, window_bounds = array<i64: 392, 128>}, {pipeline_mode = #tpu.pipeline_mode<synchronous>, transform_indices = @transform_4, window_bounds = array<i64: 16, 128>}]} {
    %c0 = arith.constant 0 : index
    %c0_0 = arith.constant 0 : index
    %0 = vector.load %arg3[%c0, %c0_0] : memref<194x192xbf16, #tpu.memory_space<vmem>>, vector<128x192xbf16>
    %c128 = arith.constant 128 : index
    %c0_1 = arith.constant 0 : index
    %1 = vector.load %arg3[%c128, %c0_1] : memref<194x192xbf16, #tpu.memory_space<vmem>>, vector<64x192xbf16>
    %c192 = arith.constant 192 : index
    %c0_2 = arith.constant 0 : index
    %2 = vector.load %arg3[%c192, %c0_2] : memref<194x192xbf16, #tpu.memory_space<vmem>>, vector<1x192xbf16>
    %c193 = arith.constant 193 : index
    %c0_3 = arith.constant 0 : index
    %3 = vector.load %arg3[%c193, %c0_3] : memref<194x192xbf16, #tpu.memory_space<vmem>>, vector<1x192xbf16>
    %c0_4 = arith.constant 0 : index
    %c0_5 = arith.constant 0 : index
    %4 = vector.load %arg4[%c0_4, %c0_5] : memref<392x128xbf16, #tpu.memory_space<vmem>>, vector<1x128xbf16>
    %c1 = arith.constant 1 : index
    %c0_6 = arith.constant 0 : index
    %5 = vector.load %arg4[%c1, %c0_6] : memref<392x128xbf16, #tpu.memory_space<vmem>>, vector<1x128xbf16>
    %c2 = arith.constant 2 : index
    %c0_7 = arith.constant 0 : index
    %6 = vector.load %arg4[%c2, %c0_7] : memref<392x128xbf16, #tpu.memory_space<vmem>>, vector<1x128xbf16>
    %c3 = arith.constant 3 : index
    %c0_8 = arith.constant 0 : index
    %7 = vector.load %arg4[%c3, %c0_8] : memref<392x128xbf16, #tpu.memory_space<vmem>>, vector<1x128xbf16>
    %c4 = arith.constant 4 : index
    %c0_9 = arith.constant 0 : index
    %8 = vector.load %arg4[%c4, %c0_9] : memref<392x128xbf16, #tpu.memory_space<vmem>>, vector<1x128xbf16>
    %c8 = arith.constant 8 : index
    %c0_10 = arith.constant 0 : index
    %9 = vector.load %arg4[%c8, %c0_10] : memref<392x128xbf16, #tpu.memory_space<vmem>>, vector<64x128xbf16>
    %c72 = arith.constant 72 : index
    %c0_11 = arith.constant 0 : index
    %10 = vector.load %arg4[%c72, %c0_11] : memref<392x128xbf16, #tpu.memory_space<vmem>>, vector<128x128xbf16>
    %c200 = arith.constant 200 : index
    %c0_12 = arith.constant 0 : index
    %11 = vector.load %arg4[%c200, %c0_12] : memref<392x128xbf16, #tpu.memory_space<vmem>>, vector<128x128xbf16>
    %c328 = arith.constant 328 : index
    %c0_13 = arith.constant 0 : index
    %12 = vector.load %arg4[%c328, %c0_13] : memref<392x128xbf16, #tpu.memory_space<vmem>>, vector<64x128xbf16>
    %13 = tpu.iota {dimensions = array<i32: 1>} : vector<16x128xi32>
    %c0_14 = arith.constant 0 : index
    %c0_15 = arith.constant 0 : index
    %c0_16 = arith.constant 0 : index
    %14 = vector.load %arg1[%c0_14, %c0_15, %c0_16] : memref<4x16x3xi32, #tpu.memory_space<vmem>>, vector<1x16x3xi32>
    %15 = vector.shape_cast %14 : vector<1x16x3xi32> to vector<16x3xi32>
    %c0_17 = arith.constant 0 : index
    %c0_18 = arith.constant 0 : index
    %c0_19 = arith.constant 0 : index
    %16 = vector.load %arg2[%c0_17, %c0_18, %c0_19] : memref<4x16x2xi32, #tpu.memory_space<vmem>>, vector<1x16x2xi32>
    %17 = vector.shape_cast %16 : vector<1x16x2xi32> to vector<16x2xi32>
    %cst = arith.constant 0.000000e+00 : f32
    %18 = vector.broadcast %cst : f32 to vector<16x128xf32>
    %19 = vector.extract_strided_slice %15 {offsets = [0, 0], sizes = [16, 1], strides = [1, 1]} : vector<16x3xi32> to vector<16x1xi32>
    %20 = vector.broadcast %19 : vector<16x1xi32> to vector<16x128xi32>
    %21 = arith.cmpi eq, %20, %13 : vector<16x128xi32>
    %22 = arith.extui %21 : vector<16x128xi1> to vector<16x128xi32>
    %23 = arith.sitofp %22 : vector<16x128xi32> to vector<16x128xf32>
    %24 = arith.addf %18, %23 : vector<16x128xf32>
    %25 = vector.extract_strided_slice %15 {offsets = [0, 1], sizes = [16, 1], strides = [1, 1]} : vector<16x3xi32> to vector<16x1xi32>
    %26 = vector.broadcast %25 : vector<16x1xi32> to vector<16x128xi32>
    %27 = arith.cmpi eq, %26, %13 : vector<16x128xi32>
    %28 = arith.extui %27 : vector<16x128xi1> to vector<16x128xi32>
    %29 = arith.sitofp %28 : vector<16x128xi32> to vector<16x128xf32>
    %30 = arith.addf %24, %29 : vector<16x128xf32>
    %31 = vector.extract_strided_slice %15 {offsets = [0, 2], sizes = [16, 1], strides = [1, 1]} : vector<16x3xi32> to vector<16x1xi32>
    %32 = vector.broadcast %31 : vector<16x1xi32> to vector<16x128xi32>
    %33 = arith.cmpi eq, %32, %13 : vector<16x128xi32>
    %34 = arith.extui %33 : vector<16x128xi1> to vector<16x128xi32>
    %35 = arith.sitofp %34 : vector<16x128xi32> to vector<16x128xf32>
    %36 = arith.addf %30, %35 : vector<16x128xf32>
    %37 = vector.extract_strided_slice %17 {offsets = [0, 0], sizes = [16, 1], strides = [1, 1]} : vector<16x2xi32> to vector<16x1xi32>
    %c64_i32 = arith.constant 64 : i32
    %38 = vector.broadcast %c64_i32 : i32 to vector<16x1xi32>
    %39 = arith.addi %37, %38 : vector<16x1xi32>
    %40 = vector.broadcast %39 : vector<16x1xi32> to vector<16x128xi32>
    %41 = arith.cmpi eq, %40, %13 : vector<16x128xi32>
    %42 = arith.extui %41 : vector<16x128xi1> to vector<16x128xi32>
    %43 = arith.sitofp %42 : vector<16x128xi32> to vector<16x128xf32>
    %44 = arith.addf %36, %43 : vector<16x128xf32>
    %45 = vector.extract_strided_slice %17 {offsets = [0, 1], sizes = [16, 1], strides = [1, 1]} : vector<16x2xi32> to vector<16x1xi32>
    %c64_i32_20 = arith.constant 64 : i32
    %46 = vector.broadcast %c64_i32_20 : i32 to vector<16x1xi32>
    %47 = arith.addi %45, %46 : vector<16x1xi32>
    %48 = vector.broadcast %47 : vector<16x1xi32> to vector<16x128xi32>
    %49 = arith.cmpi eq, %48, %13 : vector<16x128xi32>
    %50 = arith.extui %49 : vector<16x128xi1> to vector<16x128xi32>
    %51 = arith.sitofp %50 : vector<16x128xi32> to vector<16x128xf32>
    %52 = arith.addf %44, %51 : vector<16x128xf32>
    %c1_21 = arith.constant 1 : index
    %c0_22 = arith.constant 0 : index
    %c0_23 = arith.constant 0 : index
    %53 = vector.load %arg1[%c1_21, %c0_22, %c0_23] : memref<4x16x3xi32, #tpu.memory_space<vmem>>, vector<1x16x3xi32>
    %54 = vector.shape_cast %53 : vector<1x16x3xi32> to vector<16x3xi32>
    %c1_24 = arith.constant 1 : index
    %c0_25 = arith.constant 0 : index
    %c0_26 = arith.constant 0 : index
    %55 = vector.load %arg2[%c1_24, %c0_25, %c0_26] : memref<4x16x2xi32, #tpu.memory_space<vmem>>, vector<1x16x2xi32>
    %56 = vector.shape_cast %55 : vector<1x16x2xi32> to vector<16x2xi32>
    %cst_27 = arith.constant 0.000000e+00 : f32
    %57 = vector.broadcast %cst_27 : f32 to vector<16x128xf32>
    %58 = vector.extract_strided_slice %54 {offsets = [0, 0], sizes = [16, 1], strides = [1, 1]} : vector<16x3xi32> to vector<16x1xi32>
    %59 = vector.broadcast %58 : vector<16x1xi32> to vector<16x128xi32>
    %60 = arith.cmpi eq, %59, %13 : vector<16x128xi32>
    %61 = arith.extui %60 : vector<16x128xi1> to vector<16x128xi32>
    %62 = arith.sitofp %61 : vector<16x128xi32> to vector<16x128xf32>
    %63 = arith.addf %57, %62 : vector<16x128xf32>
    %64 = vector.extract_strided_slice %54 {offsets = [0, 1], sizes = [16, 1], strides = [1, 1]} : vector<16x3xi32> to vector<16x1xi32>
    %65 = vector.broadcast %64 : vector<16x1xi32> to vector<16x128xi32>
    %66 = arith.cmpi eq, %65, %13 : vector<16x128xi32>
    %67 = arith.extui %66 : vector<16x128xi1> to vector<16x128xi32>
    %68 = arith.sitofp %67 : vector<16x128xi32> to vector<16x128xf32>
    %69 = arith.addf %63, %68 : vector<16x128xf32>
    %70 = vector.extract_strided_slice %54 {offsets = [0, 2], sizes = [16, 1], strides = [1, 1]} : vector<16x3xi32> to vector<16x1xi32>
    %71 = vector.broadcast %70 : vector<16x1xi32> to vector<16x128xi32>
    %72 = arith.cmpi eq, %71, %13 : vector<16x128xi32>
    %73 = arith.extui %72 : vector<16x128xi1> to vector<16x128xi32>
    %74 = arith.sitofp %73 : vector<16x128xi32> to vector<16x128xf32>
    %75 = arith.addf %69, %74 : vector<16x128xf32>
    %76 = vector.extract_strided_slice %56 {offsets = [0, 0], sizes = [16, 1], strides = [1, 1]} : vector<16x2xi32> to vector<16x1xi32>
    %c64_i32_28 = arith.constant 64 : i32
    %77 = vector.broadcast %c64_i32_28 : i32 to vector<16x1xi32>
    %78 = arith.addi %76, %77 : vector<16x1xi32>
    %79 = vector.broadcast %78 : vector<16x1xi32> to vector<16x128xi32>
    %80 = arith.cmpi eq, %79, %13 : vector<16x128xi32>
    %81 = arith.extui %80 : vector<16x128xi1> to vector<16x128xi32>
    %82 = arith.sitofp %81 : vector<16x128xi32> to vector<16x128xf32>
    %83 = arith.addf %75, %82 : vector<16x128xf32>
    %84 = vector.extract_strided_slice %56 {offsets = [0, 1], sizes = [16, 1], strides = [1, 1]} : vector<16x2xi32> to vector<16x1xi32>
    %c64_i32_29 = arith.constant 64 : i32
    %85 = vector.broadcast %c64_i32_29 : i32 to vector<16x1xi32>
    %86 = arith.addi %84, %85 : vector<16x1xi32>
    %87 = vector.broadcast %86 : vector<16x1xi32> to vector<16x128xi32>
    %88 = arith.cmpi eq, %87, %13 : vector<16x128xi32>
    %89 = arith.extui %88 : vector<16x128xi1> to vector<16x128xi32>
    %90 = arith.sitofp %89 : vector<16x128xi32> to vector<16x128xf32>
    %91 = arith.addf %83, %90 : vector<16x128xf32>
    %c2_30 = arith.constant 2 : index
    %c0_31 = arith.constant 0 : index
    %c0_32 = arith.constant 0 : index
    %92 = vector.load %arg1[%c2_30, %c0_31, %c0_32] : memref<4x16x3xi32, #tpu.memory_space<vmem>>, vector<1x16x3xi32>
    %93 = vector.shape_cast %92 : vector<1x16x3xi32> to vector<16x3xi32>
    %c2_33 = arith.constant 2 : index
    %c0_34 = arith.constant 0 : index
    %c0_35 = arith.constant 0 : index
    %94 = vector.load %arg2[%c2_33, %c0_34, %c0_35] : memref<4x16x2xi32, #tpu.memory_space<vmem>>, vector<1x16x2xi32>
    %95 = vector.shape_cast %94 : vector<1x16x2xi32> to vector<16x2xi32>
    %cst_36 = arith.constant 0.000000e+00 : f32
    %96 = vector.broadcast %cst_36 : f32 to vector<16x128xf32>
    %97 = vector.extract_strided_slice %93 {offsets = [0, 0], sizes = [16, 1], strides = [1, 1]} : vector<16x3xi32> to vector<16x1xi32>
    %98 = vector.broadcast %97 : vector<16x1xi32> to vector<16x128xi32>
    %99 = arith.cmpi eq, %98, %13 : vector<16x128xi32>
    %100 = arith.extui %99 : vector<16x128xi1> to vector<16x128xi32>
    %101 = arith.sitofp %100 : vector<16x128xi32> to vector<16x128xf32>
    %102 = arith.addf %96, %101 : vector<16x128xf32>
    %103 = vector.extract_strided_slice %93 {offsets = [0, 1], sizes = [16, 1], strides = [1, 1]} : vector<16x3xi32> to vector<16x1xi32>
    %104 = vector.broadcast %103 : vector<16x1xi32> to vector<16x128xi32>
    %105 = arith.cmpi eq, %104, %13 : vector<16x128xi32>
    %106 = arith.extui %105 : vector<16x128xi1> to vector<16x128xi32>
    %107 = arith.sitofp %106 : vector<16x128xi32> to vector<16x128xf32>
    %108 = arith.addf %102, %107 : vector<16x128xf32>
    %109 = vector.extract_strided_slice %93 {offsets = [0, 2], sizes = [16, 1], strides = [1, 1]} : vector<16x3xi32> to vector<16x1xi32>
    %110 = vector.broadcast %109 : vector<16x1xi32> to vector<16x128xi32>
    %111 = arith.cmpi eq, %110, %13 : vector<16x128xi32>
    %112 = arith.extui %111 : vector<16x128xi1> to vector<16x128xi32>
    %113 = arith.sitofp %112 : vector<16x128xi32> to vector<16x128xf32>
    %114 = arith.addf %108, %113 : vector<16x128xf32>
    %115 = vector.extract_strided_slice %95 {offsets = [0, 0], sizes = [16, 1], strides = [1, 1]} : vector<16x2xi32> to vector<16x1xi32>
    %c64_i32_37 = arith.constant 64 : i32
    %116 = vector.broadcast %c64_i32_37 : i32 to vector<16x1xi32>
    %117 = arith.addi %115, %116 : vector<16x1xi32>
    %118 = vector.broadcast %117 : vector<16x1xi32> to vector<16x128xi32>
    %119 = arith.cmpi eq, %118, %13 : vector<16x128xi32>
    %120 = arith.extui %119 : vector<16x128xi1> to vector<16x128xi32>
    %121 = arith.sitofp %120 : vector<16x128xi32> to vector<16x128xf32>
    %122 = arith.addf %114, %121 : vector<16x128xf32>
    %123 = vector.extract_strided_slice %95 {offsets = [0, 1], sizes = [16, 1], strides = [1, 1]} : vector<16x2xi32> to vector<16x1xi32>
    %c64_i32_38 = arith.constant 64 : i32
    %124 = vector.broadcast %c64_i32_38 : i32 to vector<16x1xi32>
    %125 = arith.addi %123, %124 : vector<16x1xi32>
    %126 = vector.broadcast %125 : vector<16x1xi32> to vector<16x128xi32>
    %127 = arith.cmpi eq, %126, %13 : vector<16x128xi32>
    %128 = arith.extui %127 : vector<16x128xi1> to vector<16x128xi32>
    %129 = arith.sitofp %128 : vector<16x128xi32> to vector<16x128xf32>
    %130 = arith.addf %122, %129 : vector<16x128xf32>
    %c3_39 = arith.constant 3 : index
    %c0_40 = arith.constant 0 : index
    %c0_41 = arith.constant 0 : index
    %131 = vector.load %arg1[%c3_39, %c0_40, %c0_41] : memref<4x16x3xi32, #tpu.memory_space<vmem>>, vector<1x16x3xi32>
    %132 = vector.shape_cast %131 : vector<1x16x3xi32> to vector<16x3xi32>
    %c3_42 = arith.constant 3 : index
    %c0_43 = arith.constant 0 : index
    %c0_44 = arith.constant 0 : index
    %133 = vector.load %arg2[%c3_42, %c0_43, %c0_44] : memref<4x16x2xi32, #tpu.memory_space<vmem>>, vector<1x16x2xi32>
    %134 = vector.shape_cast %133 : vector<1x16x2xi32> to vector<16x2xi32>
    %cst_45 = arith.constant 0.000000e+00 : f32
    %135 = vector.broadcast %cst_45 : f32 to vector<16x128xf32>
    %136 = vector.extract_strided_slice %132 {offsets = [0, 0], sizes = [16, 1], strides = [1, 1]} : vector<16x3xi32> to vector<16x1xi32>
    %137 = vector.broadcast %136 : vector<16x1xi32> to vector<16x128xi32>
    %138 = arith.cmpi eq, %137, %13 : vector<16x128xi32>
    %139 = arith.extui %138 : vector<16x128xi1> to vector<16x128xi32>
    %140 = arith.sitofp %139 : vector<16x128xi32> to vector<16x128xf32>
    %141 = arith.addf %135, %140 : vector<16x128xf32>
    %142 = vector.extract_strided_slice %132 {offsets = [0, 1], sizes = [16, 1], strides = [1, 1]} : vector<16x3xi32> to vector<16x1xi32>
    %143 = vector.broadcast %142 : vector<16x1xi32> to vector<16x128xi32>
    %144 = arith.cmpi eq, %143, %13 : vector<16x128xi32>
    %145 = arith.extui %144 : vector<16x128xi1> to vector<16x128xi32>
    %146 = arith.sitofp %145 : vector<16x128xi32> to vector<16x128xf32>
    %147 = arith.addf %141, %146 : vector<16x128xf32>
    %148 = vector.extract_strided_slice %132 {offsets = [0, 2], sizes = [16, 1], strides = [1, 1]} : vector<16x3xi32> to vector<16x1xi32>
    %149 = vector.broadcast %148 : vector<16x1xi32> to vector<16x128xi32>
    %150 = arith.cmpi eq, %149, %13 : vector<16x128xi32>
    %151 = arith.extui %150 : vector<16x128xi1> to vector<16x128xi32>
    %152 = arith.sitofp %151 : vector<16x128xi32> to vector<16x128xf32>
    %153 = arith.addf %147, %152 : vector<16x128xf32>
    %154 = vector.extract_strided_slice %134 {offsets = [0, 0], sizes = [16, 1], strides = [1, 1]} : vector<16x2xi32> to vector<16x1xi32>
    %c64_i32_46 = arith.constant 64 : i32
    %155 = vector.broadcast %c64_i32_46 : i32 to vector<16x1xi32>
    %156 = arith.addi %154, %155 : vector<16x1xi32>
    %157 = vector.broadcast %156 : vector<16x1xi32> to vector<16x128xi32>
    %158 = arith.cmpi eq, %157, %13 : vector<16x128xi32>
    %159 = arith.extui %158 : vector<16x128xi1> to vector<16x128xi32>
    %160 = arith.sitofp %159 : vector<16x128xi32> to vector<16x128xf32>
    %161 = arith.addf %153, %160 : vector<16x128xf32>
    %162 = vector.extract_strided_slice %134 {offsets = [0, 1], sizes = [16, 1], strides = [1, 1]} : vector<16x2xi32> to vector<16x1xi32>
    %c64_i32_47 = arith.constant 64 : i32
    %163 = vector.broadcast %c64_i32_47 : i32 to vector<16x1xi32>
    %164 = arith.addi %162, %163 : vector<16x1xi32>
    %165 = vector.broadcast %164 : vector<16x1xi32> to vector<16x128xi32>
    %166 = arith.cmpi eq, %165, %13 : vector<16x128xi32>
    %167 = arith.extui %166 : vector<16x128xi1> to vector<16x128xi32>
    %168 = arith.sitofp %167 : vector<16x128xi32> to vector<16x128xf32>
    %169 = arith.addf %161, %168 : vector<16x128xf32>
    %170 = tpu.concatenate %52, %91, %130, %169 in 0 : vector<16x128xf32>, vector<16x128xf32>, vector<16x128xf32>, vector<16x128xf32> -> vector<64x128xf32>
    %171 = arith.truncf %170 : vector<64x128xf32> to vector<64x128xbf16>
    %cst_48 = arith.constant dense<0.000000e+00> : vector<64x192xf32>
    %172 = tpu.matmul %171, %0, %cst_48 {dimension_numbers = #tpu.dot_dimension_numbers<[1], [0], [0], [1], [0, 0, 1, 1], [], []>} : vector<64x128xbf16>, vector<128x192xbf16>, vector<64x192xf32> -> vector<64x192xf32>
    %173 = arith.extf %2 : vector<1x192xbf16> to vector<1x192xf32>
    %174 = vector.broadcast %173 : vector<1x192xf32> to vector<64x192xf32>
    %175 = arith.addf %172, %174 : vector<64x192xf32>
    %cst_49 = arith.constant 0.000000e+00 : f32
    %176 = vector.broadcast %cst_49 : f32 to vector<16x64xf32>
    %177 = vector.extract_strided_slice %175 {offsets = [0, 0], sizes = [16, 192], strides = [1, 1]} : vector<64x192xf32> to vector<16x192xf32>
    %cst_50 = arith.constant 0.000000e+00 : f32
    %178 = vector.broadcast %cst_50 : f32 to vector<16x192xf32>
    %179 = vector.extract_strided_slice %177 {offsets = [0, 0], sizes = [16, 128], strides = [1, 1]} : vector<16x192xf32> to vector<16x128xf32>
    %180 = vector.extract_strided_slice %178 {offsets = [0, 0], sizes = [16, 128], strides = [1, 1]} : vector<16x192xf32> to vector<16x128xf32>
    %181 = arith.addf %179, %180 : vector<16x128xf32>
    %182 = arith.negf %181 : vector<16x128xf32>
    %183 = math.exp %182 : vector<16x128xf32>
    %cst_51 = arith.constant 1.000000e+00 : f32
    %184 = vector.broadcast %cst_51 : f32 to vector<16x128xf32>
    %185 = arith.addf %184, %183 : vector<16x128xf32>
    %186 = arith.divf %184, %185 : vector<16x128xf32>
    %187 = vector.extract_strided_slice %186 {offsets = [0, 0], sizes = [16, 64], strides = [1, 1]} : vector<16x128xf32> to vector<16x64xf32>
    %188 = vector.extract_strided_slice %186 {offsets = [0, 64], sizes = [16, 64], strides = [1, 1]} : vector<16x128xf32> to vector<16x64xf32>
    %189 = vector.extract_strided_slice %177 {offsets = [0, 128], sizes = [16, 64], strides = [1, 1]} : vector<16x192xf32> to vector<16x64xf32>
    %190 = vector.extract_strided_slice %178 {offsets = [0, 128], sizes = [16, 64], strides = [1, 1]} : vector<16x192xf32> to vector<16x64xf32>
    %191 = vector.extract_strided_slice %3 {offsets = [0, 128], sizes = [1, 64], strides = [1, 1]} : vector<1x192xbf16> to vector<1x64xbf16>
    %192 = arith.extf %191 : vector<1x64xbf16> to vector<1x64xf32>
    %193 = vector.broadcast %192 : vector<1x64xf32> to vector<16x64xf32>
    %194 = arith.addf %190, %193 : vector<16x64xf32>
    %195 = arith.mulf %187, %194 : vector<16x64xf32>
    %196 = arith.addf %189, %195 : vector<16x64xf32>
    %197 = math.tanh %196 : vector<16x64xf32>
    %cst_52 = arith.constant 1.000000e+00 : f32
    %198 = vector.broadcast %cst_52 : f32 to vector<16x64xf32>
    %199 = arith.subf %198, %188 : vector<16x64xf32>
    %200 = arith.mulf %199, %197 : vector<16x64xf32>
    %201 = arith.mulf %188, %176 : vector<16x64xf32>
    %202 = arith.addf %200, %201 : vector<16x64xf32>
    %203 = vector.extract_strided_slice %175 {offsets = [16, 0], sizes = [16, 192], strides = [1, 1]} : vector<64x192xf32> to vector<16x192xf32>
    %204 = arith.truncf %202 : vector<16x64xf32> to vector<16x64xbf16>
    %cst_53 = arith.constant dense<0.000000e+00> : vector<16x192xf32>
    %205 = tpu.matmul %204, %1, %cst_53 {dimension_numbers = #tpu.dot_dimension_numbers<[1], [0], [0], [1], [0, 0, 1, 1], [], []>} : vector<16x64xbf16>, vector<64x192xbf16>, vector<16x192xf32> -> vector<16x192xf32>
    %206 = vector.extract_strided_slice %203 {offsets = [0, 0], sizes = [16, 128], strides = [1, 1]} : vector<16x192xf32> to vector<16x128xf32>
    %207 = vector.extract_strided_slice %205 {offsets = [0, 0], sizes = [16, 128], strides = [1, 1]} : vector<16x192xf32> to vector<16x128xf32>
    %208 = arith.addf %206, %207 : vector<16x128xf32>
    %209 = arith.negf %208 : vector<16x128xf32>
    %210 = math.exp %209 : vector<16x128xf32>
    %cst_54 = arith.constant 1.000000e+00 : f32
    %211 = vector.broadcast %cst_54 : f32 to vector<16x128xf32>
    %212 = arith.addf %211, %210 : vector<16x128xf32>
    %213 = arith.divf %211, %212 : vector<16x128xf32>
    %214 = vector.extract_strided_slice %213 {offsets = [0, 0], sizes = [16, 64], strides = [1, 1]} : vector<16x128xf32> to vector<16x64xf32>
    %215 = vector.extract_strided_slice %213 {offsets = [0, 64], sizes = [16, 64], strides = [1, 1]} : vector<16x128xf32> to vector<16x64xf32>
    %216 = vector.extract_strided_slice %203 {offsets = [0, 128], sizes = [16, 64], strides = [1, 1]} : vector<16x192xf32> to vector<16x64xf32>
    %217 = vector.extract_strided_slice %205 {offsets = [0, 128], sizes = [16, 64], strides = [1, 1]} : vector<16x192xf32> to vector<16x64xf32>
    %218 = vector.extract_strided_slice %3 {offsets = [0, 128], sizes = [1, 64], strides = [1, 1]} : vector<1x192xbf16> to vector<1x64xbf16>
    %219 = arith.extf %218 : vector<1x64xbf16> to vector<1x64xf32>
    %220 = vector.broadcast %219 : vector<1x64xf32> to vector<16x64xf32>
    %221 = arith.addf %217, %220 : vector<16x64xf32>
    %222 = arith.mulf %214, %221 : vector<16x64xf32>
    %223 = arith.addf %216, %222 : vector<16x64xf32>
    %224 = math.tanh %223 : vector<16x64xf32>
    %cst_55 = arith.constant 1.000000e+00 : f32
    %225 = vector.broadcast %cst_55 : f32 to vector<16x64xf32>
    %226 = arith.subf %225, %215 : vector<16x64xf32>
    %227 = arith.mulf %226, %224 : vector<16x64xf32>
    %228 = arith.mulf %215, %202 : vector<16x64xf32>
    %229 = arith.addf %227, %228 : vector<16x64xf32>
    %230 = vector.extract_strided_slice %175 {offsets = [32, 0], sizes = [16, 192], strides = [1, 1]} : vector<64x192xf32> to vector<16x192xf32>
    %231 = arith.truncf %229 : vector<16x64xf32> to vector<16x64xbf16>
    %cst_56 = arith.constant dense<0.000000e+00> : vector<16x192xf32>
    %232 = tpu.matmul %231, %1, %cst_56 {dimension_numbers = #tpu.dot_dimension_numbers<[1], [0], [0], [1], [0, 0, 1, 1], [], []>} : vector<16x64xbf16>, vector<64x192xbf16>, vector<16x192xf32> -> vector<16x192xf32>
    %233 = vector.extract_strided_slice %230 {offsets = [0, 0], sizes = [16, 128], strides = [1, 1]} : vector<16x192xf32> to vector<16x128xf32>
    %234 = vector.extract_strided_slice %232 {offsets = [0, 0], sizes = [16, 128], strides = [1, 1]} : vector<16x192xf32> to vector<16x128xf32>
    %235 = arith.addf %233, %234 : vector<16x128xf32>
    %236 = arith.negf %235 : vector<16x128xf32>
    %237 = math.exp %236 : vector<16x128xf32>
    %cst_57 = arith.constant 1.000000e+00 : f32
    %238 = vector.broadcast %cst_57 : f32 to vector<16x128xf32>
    %239 = arith.addf %238, %237 : vector<16x128xf32>
    %240 = arith.divf %238, %239 : vector<16x128xf32>
    %241 = vector.extract_strided_slice %240 {offsets = [0, 0], sizes = [16, 64], strides = [1, 1]} : vector<16x128xf32> to vector<16x64xf32>
    %242 = vector.extract_strided_slice %240 {offsets = [0, 64], sizes = [16, 64], strides = [1, 1]} : vector<16x128xf32> to vector<16x64xf32>
    %243 = vector.extract_strided_slice %230 {offsets = [0, 128], sizes = [16, 64], strides = [1, 1]} : vector<16x192xf32> to vector<16x64xf32>
    %244 = vector.extract_strided_slice %232 {offsets = [0, 128], sizes = [16, 64], strides = [1, 1]} : vector<16x192xf32> to vector<16x64xf32>
    %245 = vector.extract_strided_slice %3 {offsets = [0, 128], sizes = [1, 64], strides = [1, 1]} : vector<1x192xbf16> to vector<1x64xbf16>
    %246 = arith.extf %245 : vector<1x64xbf16> to vector<1x64xf32>
    %247 = vector.broadcast %246 : vector<1x64xf32> to vector<16x64xf32>
    %248 = arith.addf %244, %247 : vector<16x64xf32>
    %249 = arith.mulf %241, %248 : vector<16x64xf32>
    %250 = arith.addf %243, %249 : vector<16x64xf32>
    %251 = math.tanh %250 : vector<16x64xf32>
    %cst_58 = arith.constant 1.000000e+00 : f32
    %252 = vector.broadcast %cst_58 : f32 to vector<16x64xf32>
    %253 = arith.subf %252, %242 : vector<16x64xf32>
    %254 = arith.mulf %253, %251 : vector<16x64xf32>
    %255 = arith.mulf %242, %229 : vector<16x64xf32>
    %256 = arith.addf %254, %255 : vector<16x64xf32>
    %257 = vector.extract_strided_slice %175 {offsets = [48, 0], sizes = [16, 192], strides = [1, 1]} : vector<64x192xf32> to vector<16x192xf32>
    %258 = arith.truncf %256 : vector<16x64xf32> to vector<16x64xbf16>
    %cst_59 = arith.constant dense<0.000000e+00> : vector<16x192xf32>
    %259 = tpu.matmul %258, %1, %cst_59 {dimension_numbers = #tpu.dot_dimension_numbers<[1], [0], [0], [1], [0, 0, 1, 1], [], []>} : vector<16x64xbf16>, vector<64x192xbf16>, vector<16x192xf32> -> vector<16x192xf32>
    %260 = vector.extract_strided_slice %257 {offsets = [0, 0], sizes = [16, 128], strides = [1, 1]} : vector<16x192xf32> to vector<16x128xf32>
    %261 = vector.extract_strided_slice %259 {offsets = [0, 0], sizes = [16, 128], strides = [1, 1]} : vector<16x192xf32> to vector<16x128xf32>
    %262 = arith.addf %260, %261 : vector<16x128xf32>
    %263 = arith.negf %262 : vector<16x128xf32>
    %264 = math.exp %263 : vector<16x128xf32>
    %cst_60 = arith.constant 1.000000e+00 : f32
    %265 = vector.broadcast %cst_60 : f32 to vector<16x128xf32>
    %266 = arith.addf %265, %264 : vector<16x128xf32>
    %267 = arith.divf %265, %266 : vector<16x128xf32>
    %268 = vector.extract_strided_slice %267 {offsets = [0, 0], sizes = [16, 64], strides = [1, 1]} : vector<16x128xf32> to vector<16x64xf32>
    %269 = vector.extract_strided_slice %267 {offsets = [0, 64], sizes = [16, 64], strides = [1, 1]} : vector<16x128xf32> to vector<16x64xf32>
    %270 = vector.extract_strided_slice %257 {offsets = [0, 128], sizes = [16, 64], strides = [1, 1]} : vector<16x192xf32> to vector<16x64xf32>
    %271 = vector.extract_strided_slice %259 {offsets = [0, 128], sizes = [16, 64], strides = [1, 1]} : vector<16x192xf32> to vector<16x64xf32>
    %272 = vector.extract_strided_slice %3 {offsets = [0, 128], sizes = [1, 64], strides = [1, 1]} : vector<1x192xbf16> to vector<1x64xbf16>
    %273 = arith.extf %272 : vector<1x64xbf16> to vector<1x64xf32>
    %274 = vector.broadcast %273 : vector<1x64xf32> to vector<16x64xf32>
    %275 = arith.addf %271, %274 : vector<16x64xf32>
    %276 = arith.mulf %268, %275 : vector<16x64xf32>
    %277 = arith.addf %270, %276 : vector<16x64xf32>
    %278 = math.tanh %277 : vector<16x64xf32>
    %cst_61 = arith.constant 1.000000e+00 : f32
    %279 = vector.broadcast %cst_61 : f32 to vector<16x64xf32>
    %280 = arith.subf %279, %269 : vector<16x64xf32>
    %281 = arith.mulf %280, %278 : vector<16x64xf32>
    %282 = arith.mulf %269, %256 : vector<16x64xf32>
    %283 = arith.addf %281, %282 : vector<16x64xf32>
    %cst_62 = arith.constant 0.000000e+00 : f32
    %284 = vector.broadcast %cst_62 : f32 to vector<16x64xf32>
    %285 = arith.maximumf %283, %284 : vector<16x64xf32>
    %286 = arith.truncf %285 : vector<16x64xf32> to vector<16x64xbf16>
    %cst_63 = arith.constant dense<0.000000e+00> : vector<16x128xf32>
    %287 = tpu.matmul %286, %9, %cst_63 {dimension_numbers = #tpu.dot_dimension_numbers<[1], [0], [0], [1], [0, 0, 1, 1], [], []>} : vector<16x64xbf16>, vector<64x128xbf16>, vector<16x128xf32> -> vector<16x128xf32>
    %288 = arith.extf %4 : vector<1x128xbf16> to vector<1x128xf32>
    %289 = vector.broadcast %288 : vector<1x128xf32> to vector<16x128xf32>
    %290 = arith.addf %287, %289 : vector<16x128xf32>
    %291 = arith.truncf %290 : vector<16x128xf32> to vector<16x128xbf16>
    %cst_64 = arith.constant dense<0.000000e+00> : vector<16x128xf32>
    %292 = tpu.matmul %291, %10, %cst_64 {dimension_numbers = #tpu.dot_dimension_numbers<[1], [0], [0], [1], [0, 0, 1, 1], [], []>} : vector<16x128xbf16>, vector<128x128xbf16>, vector<16x128xf32> -> vector<16x128xf32>
    %293 = arith.extf %5 : vector<1x128xbf16> to vector<1x128xf32>
    %294 = vector.broadcast %293 : vector<1x128xf32> to vector<16x128xf32>
    %295 = arith.addf %292, %294 : vector<16x128xf32>
    %296 = arith.negf %295 : vector<16x128xf32>
    %297 = math.exp %296 : vector<16x128xf32>
    %cst_65 = arith.constant 1.000000e+00 : f32
    %298 = vector.broadcast %cst_65 : f32 to vector<16x128xf32>
    %299 = arith.addf %298, %297 : vector<16x128xf32>
    %300 = arith.divf %298, %299 : vector<16x128xf32>
    %301 = arith.truncf %300 : vector<16x128xf32> to vector<16x128xbf16>
    %cst_66 = arith.constant dense<0.000000e+00> : vector<16x128xf32>
    %302 = tpu.matmul %301, %11, %cst_66 {dimension_numbers = #tpu.dot_dimension_numbers<[1], [0], [0], [1], [0, 0, 1, 1], [], []>} : vector<16x128xbf16>, vector<128x128xbf16>, vector<16x128xf32> -> vector<16x128xf32>
    %303 = arith.extf %6 : vector<1x128xbf16> to vector<1x128xf32>
    %304 = vector.broadcast %303 : vector<1x128xf32> to vector<16x128xf32>
    %305 = arith.addf %302, %304 : vector<16x128xf32>
    %306 = vector.extract_strided_slice %300 {offsets = [0, 0], sizes = [16, 64], strides = [1, 1]} : vector<16x128xf32> to vector<16x64xf32>
    %307 = vector.extract_strided_slice %305 {offsets = [0, 0], sizes = [16, 64], strides = [1, 1]} : vector<16x128xf32> to vector<16x64xf32>
    %308 = arith.addf %306, %307 : vector<16x64xf32>
    %cst_67 = arith.constant dense<0.000000e+00> : vector<16xf32>
    %309 = vector.multi_reduction <add>, %308, %cst_67 [1] : vector<16x64xf32> to vector<16xf32>
    %310 = vector.shape_cast %309 : vector<16xf32> to vector<16x1xf32>
    %cst_68 = arith.constant 6.400000e+01 : f32
    %311 = vector.broadcast %cst_68 : f32 to vector<16x1xf32>
    %312 = arith.divf %310, %311 : vector<16x1xf32>
    %313 = vector.broadcast %312 : vector<16x1xf32> to vector<16x64xf32>
    %314 = arith.subf %308, %313 : vector<16x64xf32>
    %315 = arith.mulf %314, %314 : vector<16x64xf32>
    %cst_69 = arith.constant dense<0.000000e+00> : vector<16xf32>
    %316 = vector.multi_reduction <add>, %315, %cst_69 [1] : vector<16x64xf32> to vector<16xf32>
    %317 = vector.shape_cast %316 : vector<16xf32> to vector<16x1xf32>
    %cst_70 = arith.constant 6.400000e+01 : f32
    %318 = vector.broadcast %cst_70 : f32 to vector<16x1xf32>
    %319 = arith.divf %317, %318 : vector<16x1xf32>
    %320 = vector.broadcast %312 : vector<16x1xf32> to vector<16x64xf32>
    %321 = arith.subf %308, %320 : vector<16x64xf32>
    %cst_71 = arith.constant 9.99999974E-6 : f32
    %322 = vector.broadcast %cst_71 : f32 to vector<16x1xf32>
    %323 = arith.addf %319, %322 : vector<16x1xf32>
    %324 = math.rsqrt %323 : vector<16x1xf32>
    %325 = vector.broadcast %324 : vector<16x1xf32> to vector<16x64xf32>
    %326 = arith.mulf %321, %325 : vector<16x64xf32>
    %327 = vector.extract_strided_slice %7 {offsets = [0, 0], sizes = [1, 64], strides = [1, 1]} : vector<1x128xbf16> to vector<1x64xbf16>
    %328 = arith.extf %327 : vector<1x64xbf16> to vector<1x64xf32>
    %329 = vector.broadcast %328 : vector<1x64xf32> to vector<16x64xf32>
    %330 = arith.mulf %326, %329 : vector<16x64xf32>
    %331 = vector.extract_strided_slice %8 {offsets = [0, 0], sizes = [1, 64], strides = [1, 1]} : vector<1x128xbf16> to vector<1x64xbf16>
    %332 = arith.extf %331 : vector<1x64xbf16> to vector<1x64xf32>
    %333 = vector.broadcast %332 : vector<1x64xf32> to vector<16x64xf32>
    %334 = arith.addf %330, %333 : vector<16x64xf32>
    %335 = vector.extract_strided_slice %305 {offsets = [0, 64], sizes = [16, 64], strides = [1, 1]} : vector<16x128xf32> to vector<16x64xf32>
    %336 = arith.mulf %335, %334 : vector<16x64xf32>
    %337 = arith.negf %336 : vector<16x64xf32>
    %338 = math.exp %337 : vector<16x64xf32>
    %cst_72 = arith.constant 1.000000e+00 : f32
    %339 = vector.broadcast %cst_72 : f32 to vector<16x64xf32>
    %340 = arith.addf %339, %338 : vector<16x64xf32>
    %341 = arith.divf %339, %340 : vector<16x64xf32>
    %342 = arith.truncf %341 : vector<16x64xf32> to vector<16x64xbf16>
    %cst_73 = arith.constant dense<0.000000e+00> : vector<16x128xf32>
    %343 = tpu.matmul %342, %12, %cst_73 {dimension_numbers = #tpu.dot_dimension_numbers<[1], [0], [0], [1], [0, 0, 1, 1], [], []>} : vector<16x64xbf16>, vector<64x128xbf16>, vector<16x128xf32> -> vector<16x128xf32>
    %344 = vector.extract_strided_slice %343 {offsets = [0, 0], sizes = [16, 64], strides = [1, 1]} : vector<16x128xf32> to vector<16x64xf32>
    %345 = arith.mulf %344, %341 : vector<16x64xf32>
    %cst_74 = arith.constant dense<0.000000e+00> : vector<16xf32>
    %346 = vector.multi_reduction <add>, %345, %cst_74 [1] : vector<16x64xf32> to vector<16xf32>
    %347 = vector.shape_cast %346 : vector<16xf32> to vector<16x1xf32>
    %cst_75 = arith.constant 5.000000e-04 : f32
    %348 = vector.broadcast %cst_75 : f32 to vector<16x1xf32>
    %349 = arith.mulf %348, %347 : vector<16x1xf32>
    %350 = vector.shape_cast %349 : vector<16x1xf32> to vector<16x1xf32>
    %351 = vector.broadcast %350 : vector<16x1xf32> to vector<16x64xf32>
    %352 = tpu.concatenate %336, %351 in 1 : vector<16x64xf32>, vector<16x64xf32> -> vector<16x128xf32>
    %c0_76 = arith.constant 0 : index
    %c0_77 = arith.constant 0 : index
    %353 = vector.load %arg5[%c0_76, %c0_77] : memref<16x128xf32, #tpu.memory_space<vmem>>, vector<16x128xf32>
    tpu.vector_store %arg5[%c0_76, %c0_77], %352 {strides = array<i32>} : memref<16x128xf32, #tpu.memory_space<vmem>>, vector<16x128xf32>,
    return
  }
  func.func @transform_0(%arg0: i32) -> (i32, i32, i32) {
    %c0_i32 = arith.constant 0 : i32
    %c0_i32_0 = arith.constant 0 : i32
    %c0_i32_1 = arith.constant 0 : i32
    %c0_i32_2 = arith.constant 0 : i32
    return %c0_i32, %c0_i32_0, %c0_i32_1 : i32, i32, i32
  }
  func.func @transform_1(%arg0: i32) -> (i32, i32, i32) {
    %c0_i32 = arith.constant 0 : i32
    %c0_i32_0 = arith.constant 0 : i32
    %c0_i32_1 = arith.constant 0 : i32
    %c0_i32_2 = arith.constant 0 : i32
    return %c0_i32, %c0_i32_0, %c0_i32_1 : i32, i32, i32
  }
  func.func @transform_2(%arg0: i32) -> (i32, i32) {
    %c0_i32 = arith.constant 0 : i32
    %c0_i32_0 = arith.constant 0 : i32
    %c0_i32_1 = arith.constant 0 : i32
    return %c0_i32, %c0_i32_0 : i32, i32
  }
  func.func @transform_3(%arg0: i32) -> (i32, i32) {
    %c0_i32 = arith.constant 0 : i32
    %c0_i32_0 = arith.constant 0 : i32
    %c0_i32_1 = arith.constant 0 : i32
    return %c0_i32, %c0_i32_0 : i32, i32
  }
  func.func @transform_4(%arg0: i32) -> (i32, i32) {
    %c0_i32 = arith.constant 0 : i32
    %c0_i32_0 = arith.constant 0 : i32
    %c0_i32_1 = arith.constant 0 : i32
    return %c0_i32, %c0_i32_0 : i32, i32
  }
}

</mosaic_0001>

<llo_original>
// kernel: safedrug_forward.1
$region0: #{safedrug_forward.1}
  #allocation0 [shape = 'u32[]', space=smem, size = 0x4, offset = 0x4, fixed_abs, tag = 'smem constant byte address 0x4 - core index']
  #allocation1 [shape = 'u32[144,128]{1,0:T(1,128)}', space=vmem, size = 0x12000, scoped, tag = 'internal scratch']
  %s0 = inlined_call_operand.vmem [shape: s32[4,16,3], index: 0, kind: input, shape index: {}]
  %s1 = inlined_call_operand.vmem [shape: s32[4,16,2], index: 1, kind: input, shape index: {}]
  %s2 = inlined_call_operand.vmem [shape: bf16[194,192], index: 2, kind: input, shape index: {}]
  %s3 = inlined_call_operand.vmem [shape: bf16[392,128], index: 3, kind: input, shape index: {}]
  %s4 = inlined_call_operand.vmem [shape: f32[16,128], index: 4, kind: output, shape index: {}]
  %s5 = sld [smem:[#allocation0]]
  $region26: #{safedrug_forward.1} parent=0
    _
  %s7 = ssub.s32 1, %s5
  %s8 = scalar_select 0, %s7, %s5
  // Predicated region
  $region2: #{safedrug_forward.1} parent=0 // pred_check
    _
  $region3: #{safedrug_forward.1} parent=0 // pred_check_branch
    %10 = sbr.rel (0) target = $region5
  $region4: #{safedrug_forward.1} parent=0 // pred_region
    _
  $region5: #{safedrug_forward.1} parent=0 // pred_fallthru
    _
  // Predicated region
  $region6: #{safedrug_forward.1} parent=0 // pred_check
    _
  $region7: #{safedrug_forward.1} parent=0 // pred_check_branch
    %12 = sbr.rel (0) target = $region9
  $region8: #{safedrug_forward.1} parent=0 // pred_region
    _
  $region9: #{safedrug_forward.1} parent=0 // pred_fallthru
    _
  // Predicated region
  $region10: #{safedrug_forward.1} parent=0 // pred_check
    _
  $region11: #{safedrug_forward.1} parent=0 // pred_check_branch
    %14 = sbr.rel (0) target = $region13
  $region12: #{safedrug_forward.1} parent=0 // pred_region
    _
  $region13: #{safedrug_forward.1} parent=0 // pred_fallthru
    _
  // Predicated region
  $region14: #{safedrug_forward.1} parent=0 // pred_check
    _
  $region15: #{safedrug_forward.1} parent=0 // pred_check_branch
    %16 = sbr.rel (0) target = $region17
  $region16: #{safedrug_forward.1} parent=0 // pred_region
    _
  $region17: #{safedrug_forward.1} parent=0 // pred_fallthru
    _
  %v18 = vld [vmem:[%s2] sm:$0xff]
  %v19 = vld [vmem:[%s2 + $0x8] sm:$0xff]
  %v20 = vld [vmem:[%s2 + $0x10] sm:$0xff]
  %v21 = vld [vmem:[%s2 + $0x18] sm:$0xff]
  %v22 = vld [vmem:[%s2 + $0x20] sm:$0xff]
  %v23 = vld [vmem:[%s2 + $0x28] sm:$0xff]
  %v24 = vld [vmem:[%s2 + $0x30] sm:$0xff]
  %v25 = vld [vmem:[%s2 + $0x38] sm:$0xff]
  %v26 = vld [vmem:[%s2 + $0x40] sm:$0xff]
  %v27 = vld [vmem:[%s2 + $0x48] sm:$0xff]
  %v28 = vld [vmem:[%s2 + $0x50] sm:$0xff]
  %v29 = vld [vmem:[%s2 + $0x58] sm:$0xff]
  %v30 = vld [vmem:[%s2 + $0x60] sm:$0xff]
  %v31 = vld [vmem:[%s2 + $0x68] sm:$0xff]
  %v32 = vld [vmem:[%s2 + $0x70] sm:$0xff]
  %v33 = vld [vmem:[%s2 + $0x78] sm:$0xff]
  %v34 = vld [vmem:[%s2 + $0x80] sm:$0xff]
  %v35 = vld [vmem:[%s2 + $0x88] sm:$0xff]
  %v36 = vld [vmem:[%s2 + $0x90] sm:$0xff]
  %v37 = vld [vmem:[%s2 + $0x98] sm:$0xff]
  %v38 = vld [vmem:[%s2 + $0xa0] sm:$0xff]
  %v39 = vld [vmem:[%s2 + $0xa8] sm:$0xff]
  %v40 = vld [vmem:[%s2 + $0xb0] sm:$0xff]
  %v41 = vld [vmem:[%s2 + $0xb8] sm:$0xff]
  %v42 = vld [vmem:[%s2 + $0xc0] sm:$0x11]
  %v43 = vld [vmem:[%s3] sm:$0x1]
  %v44 = vld [vmem:[%s3] sm:$0x2]
  %v45 = vld [vmem:[%s3] sm:$0x4]
  %v46 = vld [vmem:[%s3 + $0x4] sm:$0xf]
  %v47 = vld [vmem:[%s3 + $0x8] sm:$0xf]
  %v48 = vld [vmem:[%s3 + $0xc] sm:$0xf]
  %v49 = vld [vmem:[%s3 + $0x10] sm:$0xf]
  %v50 = vld [vmem:[%s3 + $0x14] sm:$0xf]
  %v51 = vld [vmem:[%s3 + $0x18] sm:$0xf]
  %v52 = vld [vmem:[%s3 + $0x1c] sm:$0xf]
  %v53 = vld [vmem:[%s3 + $0x20] sm:$0xf]
  %v54 = vld [vmem:[%s3 + $0x24] sm:$0xf]
  %v55 = vld [vmem:[%s3 + $0x28] sm:$0xf]
  %v56 = vld [vmem:[%s3 + $0x2c] sm:$0xf]
  %v57 = vld [vmem:[%s3 + $0x30] sm:$0xf]
  %v58 = vld [vmem:[%s3 + $0x34] sm:$0xf]
  %v59 = vld [vmem:[%s3 + $0x38] sm:$0xf]
  %v60 = vld [vmem:[%s3 + $0x3c] sm:$0xf]
  %v61 = vld [vmem:[%s3 + $0x40] sm:$0xf]
  %v62 = vld [vmem:[%s3 + $0x44] sm:$0xf]
  %v63 = vld [vmem:[%s3 + $0x48] sm:$0xf]
  %v64 = vld [vmem:[%s3 + $0x4c] sm:$0xf]
  %v65 = vld [vmem:[%s3 + $0x50] sm:$0xf]
  %v66 = vld [vmem:[%s3 + $0x54] sm:$0xf]
  %v67 = vld [vmem:[%s3 + $0x58] sm:$0xf]
  %v68 = vld [vmem:[%s3 + $0x5c] sm:$0xf]
  %v69 = vld [vmem:[%s3 + $0x60] sm:$0xf]
  %v70 = vld [vmem:[%s3 + $0x64] sm:$0xf]
  %v71 = vld [vmem:[%s3 + $0x68] sm:$0xf]
  %v72 = vld [vmem:[%s3 + $0x6c] sm:$0xf]
  %v73 = vld [vmem:[%s3 + $0x70] sm:$0xf]
  %v74 = vld [vmem:[%s3 + $0x74] sm:$0xf]
  %v75 = vld [vmem:[%s3 + $0x78] sm:$0xf]
  %v76 = vld [vmem:[%s3 + $0x7c] sm:$0xf]
  %v77 = vld [vmem:[%s3 + $0x80] sm:$0xf]
  %v78 = vld [vmem:[%s3 + $0x84] sm:$0xf]
  %v79 = vld [vmem:[%s3 + $0x88] sm:$0xf]
  %v80 = vld [vmem:[%s3 + $0x8c] sm:$0xf]
  %v81 = vld [vmem:[%s3 + $0x90] sm:$0xf]
  %v82 = vld [vmem:[%s3 + $0x94] sm:$0xf]
  %v83 = vld [vmem:[%s3 + $0x98] sm:$0xf]
  %v84 = vld [vmem:[%s3 + $0x9c] sm:$0xf]
  %v85 = vld [vmem:[%s3 + $0xa0] sm:$0xf]
  %v86 = vld [vmem:[%s3 + $0xa4] sm:$0xf]
  %v87 = vld [vmem:[%s3 + $0xa8] sm:$0xf]
  %v88 = vld [vmem:[%s3 + $0xac] sm:$0xf]
  %v89 = vld [vmem:[%s3 + $0xb0] sm:$0xf]
  %v90 = vld [vmem:[%s3 + $0xb4] sm:$0xf]
  %v91 = vld [vmem:[%s3 + $0xb8] sm:$0xf]
  %v92 = vld [vmem:[%s3 + $0xbc] sm:$0xf]
  %v93 = vld [vmem:[%s3 + $0xc0] sm:$0xf]
  %v94 = vlaneseq
  %v95 = vand.u32 %v94, 127
  %v96 = vld [vmem:[%s0] sm:$0xff]
  %v97 = vld [vmem:[%s0 + $0x8] sm:$0xff]
  %v98 = vld [vmem:[%s1] sm:$0xff]
  %v99 = vld [vmem:[%s1 + $0x8] sm:$0xff]
  %100 = vset.pattern.permute.xlu0 0
  %101 = vperm.xlu0 %100, %v96
  %v102 = vpop.permute.xlu0 %101
  %103 = vset.pattern.permute.xlu0 0
  %104 = vperm.xlu0 %103, %v97
  %v105 = vpop.permute.xlu0 %104
  %vm106 = vcmp.eq.s32.totalorder %v102, %v95
  %vm107 = vcmp.eq.s32.totalorder %v105, %v95
  %v108 = vsel %vm106, 1, 0
  %v109 = vsel %vm107, 1, 0
  %v110 = vcvt.s32.f32 %v108
  %v111 = vcvt.s32.f32 %v109
  %v112 = vadd.f32 %v110, 0.0
  %v113 = vadd.f32 %v111, 0.0
  %114 = vset.pattern.permute.xlu0 1
  %115 = vperm.xlu0 %114, %v96
  %v116 = vpop.permute.xlu0 %115
  %117 = vset.pattern.permute.xlu0 1
  %118 = vperm.xlu0 %117, %v97
  %v119 = vpop.permute.xlu0 %118
  %vm120 = vcmp.eq.s32.totalorder %v116, %v95
  %vm121 = vcmp.eq.s32.totalorder %v119, %v95
  %v122 = vsel %vm120, 1, 0
  %v123 = vsel %vm121, 1, 0
  %v124 = vcvt.s32.f32 %v122
  %v125 = vcvt.s32.f32 %v123
  %v126 = vadd.f32 %v112, %v124
  %v127 = vadd.f32 %v113, %v125
  %128 = vset.pattern.permute.xlu0 2
  %129 = vperm.xlu0 %128, %v96
  %v130 = vpop.permute.xlu0 %129
  %131 = vset.pattern.permute.xlu0 2
  %132 = vperm.xlu0 %131, %v97
  %v133 = vpop.permute.xlu0 %132
  %vm134 = vcmp.eq.s32.totalorder %v130, %v95
  %vm135 = vcmp.eq.s32.totalorder %v133, %v95
  %v136 = vsel %vm134, 1, 0
  %v137 = vsel %vm135, 1, 0
  %v138 = vcvt.s32.f32 %v136
  %v139 = vcvt.s32.f32 %v137
  %v140 = vadd.f32 %v126, %v138
  %v141 = vadd.f32 %v127, %v139
  %v142 = vadd.s32 %v98, 64
  %v143 = vadd.s32 %v99, 64
  %144 = vset.pattern.permute.xlu0 0
  %145 = vperm.xlu0 %144, %v142
  %v146 = vpop.permute.xlu0 %145
  %147 = vset.pattern.permute.xlu0 0
  %148 = vperm.xlu0 %147, %v143
  %v149 = vpop.permute.xlu0 %148
  %vm150 = vcmp.eq.s32.totalorder %v146, %v95
  %vm151 = vcmp.eq.s32.totalorder %v149, %v95
  %v152 = vsel %vm150, 1, 0
  %v153 = vsel %vm151, 1, 0
  %v154 = vcvt.s32.f32 %v152
  %v155 = vcvt.s32.f32 %v153
  %v156 = vadd.f32 %v140, %v154
  %v157 = vadd.f32 %v141, %v155
  %158 = vset.pattern.permute.xlu0 1
  %159 = vperm.xlu0 %158, %v142
  %v160 = vpop.permute.xlu0 %159
  %161 = vset.pattern.permute.xlu0 1
  %162 = vperm.xlu0 %161, %v143
  %v163 = vpop.permute.xlu0 %162
  %vm164 = vcmp.eq.s32.totalorder %v160, %v95
  %vm165 = vcmp.eq.s32.totalorder %v163, %v95
  %v166 = vsel %vm164, 1, 0
  %v167 = vsel %vm165, 1, 0
  %v168 = vcvt.s32.f32 %v166
  %v169 = vcvt.s32.f32 %v167
  %v170 = vadd.f32 %v156, %v168
  %v171 = vadd.f32 %v157, %v169
  %s172 = scalar_lea.vmem %s0, 16
  %v173 = vld [vmem:[%s172] sm:$0xff]
  %v174 = vld [vmem:[%s172 + $0x8] sm:$0xff]
  %s175 = scalar_lea.vmem %s1, 16
  %v176 = vld [vmem:[%s175] sm:$0xff]
  %v177 = vld [vmem:[%s175 + $0x8] sm:$0xff]
  %178 = vset.pattern.permute.xlu0 0
  %179 = vperm.xlu0 %178, %v173
  %v180 = vpop.permute.xlu0 %179
  %181 = vset.pattern.permute.xlu0 0
  %182 = vperm.xlu0 %181, %v174
  %v183 = vpop.permute.xlu0 %182
  %vm184 = vcmp.eq.s32.totalorder %v180, %v95
  %vm185 = vcmp.eq.s32.totalorder %v183, %v95
  %v186 = vsel %vm184, 1, 0
  %v187 = vsel %vm185, 1, 0
  %v188 = vcvt.s32.f32 %v186
  %v189 = vcvt.s32.f32 %v187
  %v190 = vadd.f32 %v188, 0.0
  %v191 = vadd.f32 %v189, 0.0
  %192 = vset.pattern.permute.xlu0 1
  %193 = vperm.xlu0 %192, %v173
  %v194 = vpop.permute.xlu0 %193
  %195 = vset.pattern.permute.xlu0 1
  %196 = vperm.xlu0 %195, %v174
  %v197 = vpop.permute.xlu0 %196
  %vm198 = vcmp.eq.s32.totalorder %v194, %v95
  %vm199 = vcmp.eq.s32.totalorder %v197, %v95
  %v200 = vsel %vm198, 1, 0
  %v201 = vsel %vm199, 1, 0
  %v202 = vcvt.s32.f32 %v200
  %v203 = vcvt.s32.f32 %v201
  %v204 = vadd.f32 %v190, %v202
  %v205 = vadd.f32 %v191, %v203
  %206 = vset.pattern.permute.xlu0 2
  %207 = vperm.xlu0 %206, %v173
  %v208 = vpop.permute.xlu0 %207
  %209 = vset.pattern.permute.xlu0 2
  %210 = vperm.xlu0 %209, %v174
  %v211 = vpop.permute.xlu0 %210
  %vm212 = vcmp.eq.s32.totalorder %v208, %v95
  %vm213 = vcmp.eq.s32.totalorder %v211, %v95
  %v214 = vsel %vm212, 1, 0
  %v215 = vsel %vm213, 1, 0
  %v216 = vcvt.s32.f32 %v214
  %v217 = vcvt.s32.f32 %v215
  %v218 = vadd.f32 %v204, %v216
  %v219 = vadd.f32 %v205, %v217
  %v220 = vadd.s32 %v176, 64
  %v221 = vadd.s32 %v177, 64
  %222 = vset.pattern.permute.xlu0 0
  %223 = vperm.xlu0 %222, %v220
  %v224 = vpop.permute.xlu0 %223
  %225 = vset.pattern.permute.xlu0 0
  %226 = vperm.xlu0 %225, %v221
  %v227 = vpop.permute.xlu0 %226
  %vm228 = vcmp.eq.s32.totalorder %v224, %v95
  %vm229 = vcmp.eq.s32.totalorder %v227, %v95
  %v230 = vsel %vm228, 1, 0
  %v231 = vsel %vm229, 1, 0
  %v232 = vcvt.s32.f32 %v230
  %v233 = vcvt.s32.f32 %v231
  %v234 = vadd.f32 %v218, %v232
  %v235 = vadd.f32 %v219, %v233
  %236 = vset.pattern.permute.xlu0 1
  %237 = vperm.xlu0 %236, %v220
  %v238 = vpop.permute.xlu0 %237
  %239 = vset.pattern.permute.xlu0 1
  %240 = vperm.xlu0 %239, %v221
  %v241 = vpop.permute.xlu0 %240
  %vm242 = vcmp.eq.s32.totalorder %v238, %v95
  %vm243 = vcmp.eq.s32.totalorder %v241, %v95
  %v244 = vsel %vm242, 1, 0
  %v245 = vsel %vm243, 1, 0
  %v246 = vcvt.s32.f32 %v244
  %v247 = vcvt.s32.f32 %v245
  %v248 = vadd.f32 %v234, %v246
  %v249 = vadd.f32 %v235, %v247
  %s250 = scalar_lea.vmem %s0, 32
  %v251 = vld [vmem:[%s250] sm:$0xff]
  %v252 = vld [vmem:[%s250 + $0x8] sm:$0xff]
  %s253 = scalar_lea.vmem %s1, 32
  %v254 = vld [vmem:[%s253] sm:$0xff]
  %v255 = vld [vmem:[%s253 + $0x8] sm:$0xff]
  %256 = vset.pattern.permute.xlu0 0
  %257 = vperm.xlu0 %256, %v251
  %v258 = vpop.permute.xlu0 %257
  %259 = vset.pattern.permute.xlu0 0
  %260 = vperm.xlu0 %259, %v252
  %v261 = vpop.permute.xlu0 %260
  %vm262 = vcmp.eq.s32.totalorder %v258, %v95
  %vm263 = vcmp.eq.s32.totalorder %v261, %v95
  %v264 = vsel %vm262, 1, 0
  %v265 = vsel %vm263, 1, 0
  %v266 = vcvt.s32.f32 %v264
  %v267 = vcvt.s32.f32 %v265
  %v268 = vadd.f32 %v266, 0.0
  %v269 = vadd.f32 %v267, 0.0
  %270 = vset.pattern.permute.xlu0 1
  %271 = vperm.xlu0 %270, %v251
  %v272 = vpop.permute.xlu0 %271
  %273 = vset.pattern.permute.xlu0 1
  %274 = vperm.xlu0 %273, %v252
  %v275 = vpop.permute.xlu0 %274
  %vm276 = vcmp.eq.s32.totalorder %v272, %v95
  %vm277 = vcmp.eq.s32.totalorder %v275, %v95
  %v278 = vsel %vm276, 1, 0
  %v279 = vsel %vm277, 1, 0
  %v280 = vcvt.s32.f32 %v278
  %v281 = vcvt.s32.f32 %v279
  %v282 = vadd.f32 %v268, %v280
  %v283 = vadd.f32 %v269, %v281
  %284 = vset.pattern.permute.xlu0 2
  %285 = vperm.xlu0 %284, %v251
  %v286 = vpop.permute.xlu0 %285
  %287 = vset.pattern.permute.xlu0 2
  %288 = vperm.xlu0 %287, %v252
  %v289 = vpop.permute.xlu0 %288
  %vm290 = vcmp.eq.s32.totalorder %v286, %v95
  %vm291 = vcmp.eq.s32.totalorder %v289, %v95
  %v292 = vsel %vm290, 1, 0
  %v293 = vsel %vm291, 1, 0
  %v294 = vcvt.s32.f32 %v292
  %v295 = vcvt.s32.f32 %v293
  %v296 = vadd.f32 %v282, %v294
  %v297 = vadd.f32 %v283, %v295
  %v298 = vadd.s32 %v254, 64
  %v299 = vadd.s32 %v255, 64
  %300 = vset.pattern.permute.xlu0 0
  %301 = vperm.xlu0 %300, %v298
  %v302 = vpop.permute.xlu0 %301
  %303 = vset.pattern.permute.xlu0 0
  %304 = vperm.xlu0 %303, %v299
  %v305 = vpop.permute.xlu0 %304
  %vm306 = vcmp.eq.s32.totalorder %v302, %v95
  %vm307 = vcmp.eq.s32.totalorder %v305, %v95
  %v308 = vsel %vm306, 1, 0
  %v309 = vsel %vm307, 1, 0
  %v310 = vcvt.s32.f32 %v308
  %v311 = vcvt.s32.f32 %v309
  %v312 = vadd.f32 %v296, %v310
  %v313 = vadd.f32 %v297, %v311
  %314 = vset.pattern.permute.xlu0 1
  %315 = vperm.xlu0 %314, %v298
  %v316 = vpop.permute.xlu0 %315
  %317 = vset.pattern.permute.xlu0 1
  %318 = vperm.xlu0 %317, %v299
  %v319 = vpop.permute.xlu0 %318
  %vm320 = vcmp.eq.s32.totalorder %v316, %v95
  %vm321 = vcmp.eq.s32.totalorder %v319, %v95
  %v322 = vsel %vm320, 1, 0
  %v323 = vsel %vm321, 1, 0
  %v324 = vcvt.s32.f32 %v322
  %v325 = vcvt.s32.f32 %v323
  %v326 = vadd.f32 %v312, %v324
  %v327 = vadd.f32 %v313, %v325
  %s328 = scalar_lea.vmem %s0, 48
  %v329 = vld [vmem:[%s328] sm:$0xff]
  %v330 = vld [vmem:[%s328 + $0x8] sm:$0xff]
  %s331 = scalar_lea.vmem %s1, 48
  %v332 = vld [vmem:[%s331] sm:$0xff]
  %v333 = vld [vmem:[%s331 + $0x8] sm:$0xff]
  %334 = vset.pattern.permute.xlu0 0
  %335 = vperm.xlu0 %334, %v329
  %v336 = vpop.permute.xlu0 %335
  %337 = vset.pattern.permute.xlu0 0
  %338 = vperm.xlu0 %337, %v330
  %v339 = vpop.permute.xlu0 %338
  %vm340 = vcmp.eq.s32.totalorder %v336, %v95
  %vm341 = vcmp.eq.s32.totalorder %v339, %v95
  %v342 = vsel %vm340, 1, 0
  %v343 = vsel %vm341, 1, 0
  %v344 = vcvt.s32.f32 %v342
  %v345 = vcvt.s32.f32 %v343
  %v346 = vadd.f32 %v344, 0.0
  %v347 = vadd.f32 %v345, 0.0
  %348 = vset.pattern.permute.xlu0 1
  %349 = vperm.xlu0 %348, %v329
  %v350 = vpop.permute.xlu0 %349
  %351 = vset.pattern.permute.xlu0 1
  %352 = vperm.xlu0 %351, %v330
  %v353 = vpop.permute.xlu0 %352
  %vm354 = vcmp.eq.s32.totalorder %v350, %v95
  %vm355 = vcmp.eq.s32.totalorder %v353, %v95
  %v356 = vsel %vm354, 1, 0
  %v357 = vsel %vm355, 1, 0
  %v358 = vcvt.s32.f32 %v356
  %v359 = vcvt.s32.f32 %v357
  %v360 = vadd.f32 %v346, %v358
  %v361 = vadd.f32 %v347, %v359
  %362 = vset.pattern.permute.xlu0 2
  %363 = vperm.xlu0 %362, %v329
  %v364 = vpop.permute.xlu0 %363
  %365 = vset.pattern.permute.xlu0 2
  %366 = vperm.xlu0 %365, %v330
  %v367 = vpop.permute.xlu0 %366
  %vm368 = vcmp.eq.s32.totalorder %v364, %v95
  %vm369 = vcmp.eq.s32.totalorder %v367, %v95
  %v370 = vsel %vm368, 1, 0
  %v371 = vsel %vm369, 1, 0
  %v372 = vcvt.s32.f32 %v370
  %v373 = vcvt.s32.f32 %v371
  %v374 = vadd.f32 %v360, %v372
  %v375 = vadd.f32 %v361, %v373
  %v376 = vadd.s32 %v332, 64
  %v377 = vadd.s32 %v333, 64
  %378 = vset.pattern.permute.xlu0 0
  %379 = vperm.xlu0 %378, %v376
  %v380 = vpop.permute.xlu0 %379
  %381 = vset.pattern.permute.xlu0 0
  %382 = vperm.xlu0 %381, %v377
  %v383 = vpop.permute.xlu0 %382
  %vm384 = vcmp.eq.s32.totalorder %v380, %v95
  %vm385 = vcmp.eq.s32.totalorder %v383, %v95
  %v386 = vsel %vm384, 1, 0
  %v387 = vsel %vm385, 1, 0
  %v388 = vcvt.s32.f32 %v386
  %v389 = vcvt.s32.f32 %v387
  %v390 = vadd.f32 %v374, %v388
  %v391 = vadd.f32 %v375, %v389
  %392 = vset.pattern.permute.xlu0 1
  %393 = vperm.xlu0 %392, %v376
  %v394 = vpop.permute.xlu0 %393
  %395 = vset.pattern.permute.xlu0 1
  %396 = vperm.xlu0 %395, %v377
  %v397 = vpop.permute.xlu0 %396
  %vm398 = vcmp.eq.s32.totalorder %v394, %v95
  %vm399 = vcmp.eq.s32.totalorder %v397, %v95
  %v400 = vsel %vm398, 1, 0
  %v401 = vsel %vm399, 1, 0
  %v402 = vcvt.s32.f32 %v400
  %v403 = vcvt.s32.f32 %v401
  %v404 = vadd.f32 %v390, %v402
  %v405 = vadd.f32 %v391, %v403
  %v406 = vpack.c.bf16 %v171, %v170
  %v407 = vpack.c.bf16 %v249, %v248
  %v408 = vpack.c.bf16 %v327, %v326
  %v409 = vpack.c.bf16 %v405, %v404
  %v410 = vunpack.c.l.bf16 %v42
  %v411 = vunpack.c.h.bf16 %v42
  %v412 = vlaneseq
  %v413 = vshrl.u32 %v412, 7
  %v414 = vsub.s32 0, %v413
  %v415 = vrot.slane %v410, %v414
  %v416 = vlaneseq
  %v417 = vshrl.u32 %v416, 7
  %v418 = vsub.s32 0, %v417
  %v419 = vrot.slane %v411, %v418
  %v436 = vunpack.c.l.b16 %v18
  %v437 = vunpack.c.h.b16 %v18
  %v438 = vunpack.c.l.b16 %v19
  %v439 = vunpack.c.h.b16 %v19
  %v440 = vunpack.c.l.b16 %v20
  %v441 = vunpack.c.h.b16 %v20
  %v442 = vunpack.c.l.b16 %v21
  %v443 = vunpack.c.h.b16 %v21
  %v444 = vunpack.c.l.b16 %v22
  %v445 = vunpack.c.h.b16 %v22
  %v446 = vunpack.c.l.b16 %v23
  %v447 = vunpack.c.h.b16 %v23
  %v448 = vunpack.c.l.b16 %v24
  %v449 = vunpack.c.h.b16 %v24
  %v450 = vunpack.c.l.b16 %v25
  %v451 = vunpack.c.h.b16 %v25
  %v452 = vunpack.c.l.b16 %v26
  %v453 = vunpack.c.h.b16 %v26
  %v454 = vunpack.c.l.b16 %v27
  %v455 = vunpack.c.h.b16 %v27
  %v456 = vunpack.c.l.b16 %v28
  %v457 = vunpack.c.h.b16 %v28
  %v458 = vunpack.c.l.b16 %v29
  %v459 = vunpack.c.h.b16 %v29
  %v460 = vunpack.c.l.b16 %v30
  %v461 = vunpack.c.h.b16 %v30
  %v462 = vunpack.c.l.b16 %v31
  %v463 = vunpack.c.h.b16 %v31
  %v464 = vunpack.c.l.b16 %v32
  %v465 = vunpack.c.h.b16 %v32
  %v466 = vunpack.c.l.b16 %v33
  %v467 = vunpack.c.h.b16 %v33
  %v468 = vpack.c.b16 %v438, %v436
  %v469 = vpack.c.b16 %v439, %v437
  %v470 = vpack.c.b16 %v442, %v440
  %v471 = vpack.c.b16 %v443, %v441
  %v472 = vpack.c.b16 %v446, %v444
  %v473 = vpack.c.b16 %v447, %v445
  %v474 = vpack.c.b16 %v450, %v448
  %v475 = vpack.c.b16 %v451, %v449
  %v476 = vpack.c.b16 %v454, %v452
  %v477 = vpack.c.b16 %v455, %v453
  %v478 = vpack.c.b16 %v458, %v456
  %v479 = vpack.c.b16 %v459, %v457
  %v480 = vpack.c.b16 %v462, %v460
  %v481 = vpack.c.b16 %v463, %v461
  %v482 = vpack.c.b16 %v466, %v464
  %v483 = vpack.c.b16 %v467, %v465
  %500 = vmatprep.subr.bf16.mxu0 %v469
  %501 = vmatpush1.bf16.msra.mxu0 %v468
  %502 = vmatprep.subr.bf16.mxu0 %v471
  %503 = vmatpush1.bf16.msra.mxu0 %v470
  %504 = vmatprep.subr.bf16.mxu0 %v473
  %505 = vmatpush1.bf16.msra.mxu0 %v472
  %506 = vmatprep.subr.bf16.mxu0 %v475
  %507 = vmatpush1.bf16.msra.mxu0 %v474
  %508 = vmatprep.subr.bf16.mxu0 %v477
  %509 = vmatpush1.bf16.msra.mxu0 %v476
  %510 = vmatprep.subr.bf16.mxu0 %v479
  %511 = vmatpush1.bf16.msra.mxu0 %v478
  %512 = vmatprep.subr.bf16.mxu0 %v481
  %513 = vmatpush1.bf16.msra.mxu0 %v480
  %514 = vmatprep.subr.bf16.mxu0 %v483
  %515 = vmatpush1.bf16.msra.mxu0 %v482
  %516 = vmatprep.subr.bf16.mxu0 0
  %517 = vmatpush1.bf16.msra.mxu0 0
  %518 = vmatprep.subr.bf16.mxu0 0
  %519 = vmatpush1.bf16.msra.mxu0 0
  %520 = vmatprep.subr.bf16.mxu0 0
  %521 = vmatpush1.bf16.msra.mxu0 0
  %522 = vmatprep.subr.bf16.mxu0 0
  %523 = vmatpush1.bf16.msra.mxu0 0
  %524 = vmatprep.subr.bf16.mxu0 0
  %525 = vmatpush1.bf16.msra.mxu0 0
  %526 = vmatprep.subr.bf16.mxu0 0
  %527 = vmatpush1.bf16.msra.mxu0 0
  %528 = vmatprep.subr.bf16.mxu0 0
  %529 = vmatpush1.bf16.msra.mxu0 0
  %530 = vmatprep.subr.bf16.mxu0 0
  %531 = vmatpush1.bf16.msra.mxu0 0
  %532 = vmatprep.mubr.bf16.mxu0 0
  %533 = vmatmul.mubr.bf16.gmra.mrb[0].mxu0 %v406
  %v534 = vpop.f32.mrb[0].mxu0
  %v535 = vadd.f32 %v415, %v534
  %v536 = vpop.f32.mrb[0].mxu0
  %v537 = vadd.f32 %v419, %v536
  %v538 = vpop.f32.mrb[0].mxu0
  %v539 = vadd.f32 %v415, %v538
  %v540 = vpop.f32.mrb[0].mxu0
  %v541 = vadd.f32 %v419, %v540
  %542 = vmatprep.mubr.bf16.mxu0 0
  %543 = vmatmul.mubr.bf16.gmra.mrb[0].mxu0 %v407
  %v544 = vpop.f32.mrb[0].mxu0
  %v545 = vadd.f32 %v415, %v544
  %v546 = vpop.f32.mrb[0].mxu0
  %v547 = vadd.f32 %v419, %v546
  %v548 = vpop.f32.mrb[0].mxu0
  %v549 = vadd.f32 %v415, %v548
  %v550 = vpop.f32.mrb[0].mxu0
  %v551 = vadd.f32 %v419, %v550
  %552 = vmatprep.mubr.bf16.mxu0 0
  %553 = vmatmul.mubr.bf16.gmra.mrb[0].mxu0 %v408
  %v554 = vpop.f32.mrb[0].mxu0
  %v555 = vadd.f32 %v415, %v554
  %v556 = vpop.f32.mrb[0].mxu0
  %v557 = vadd.f32 %v419, %v556
  %v558 = vpop.f32.mrb[0].mxu0
  %v559 = vadd.f32 %v415, %v558
  %v560 = vpop.f32.mrb[0].mxu0
  %v561 = vadd.f32 %v419, %v560
  %562 = vmatprep.mubr.bf16.mxu0 0
  %563 = vmatmul.mubr.bf16.gmra.mrb[0].mxu0 %v409
  %v564 = vpop.f32.mrb[0].mxu0
  %v565 = vadd.f32 %v415, %v564
  %v566 = vpop.f32.mrb[0].mxu0
  %v567 = vadd.f32 %v419, %v566
  %v568 = vpop.f32.mrb[0].mxu0
  %v569 = vadd.f32 %v415, %v568
  %v570 = vpop.f32.mrb[0].mxu0
  %v571 = vadd.f32 %v419, %v570
  %572 = vdwg.mxu0
  %v573 = vadd.f32 %v535, 0.0
  %v574 = vadd.f32 %v539, 0.0
  %v575 = vxor.u32 %v573, 2147483648
  %v576 = vxor.u32 %v574, 2147483648
  %v577 = vmul.f32 %v575, 1.442695
  %v578 = vpow.pop %v577
  %v579 = vmul.f32 %v576, 1.442695
  %v580 = vpow.pop %v579
  %v581 = vadd.f32 %v578, 1.0
  %v582 = vadd.f32 %v580, 1.0
  %v583 = vrcp.pop %v581
  %v584 = vmul.f32 1.0, %v583
  %v585 = vrcp.pop %v582
  %v586 = vmul.f32 1.0, %v585
  %v588 = vrot.slane %v42, 4
  %v590 = vunpack.c.l.bf16 %v588
  %v591 = vlaneseq
  %v592 = vshrl.u32 %v591, 7
  %v593 = vsub.s32 1, %v592
  %v594 = vrot.slane %v590, %v593
  %v595 = vadd.f32 %v594, 0.0
  %v596 = vmul.f32 %v584, %v595
  %v597 = vmul.f32 %v586, %v595
  %v598 = vadd.f32 %v537, %v596
  %v599 = vadd.f32 %v541, %v597
  %v600 = vtanh.pop %v598
  %v601 = vtanh.pop %v599
  %v602 = vsub.f32 1.0, %v584
  %v603 = vsub.f32 1.0, %v586
  %606 = vrot.lane.b32.xlu0 %v600, 64
  %v607 = vpop.permute.xlu0 %606
  %608 = vrot.lane.b32.xlu0 %v601, 64
  %v609 = vpop.permute.xlu0 %608
  %v612 = vmul.f32 %v602, %v607
  %v613 = vmul.f32 %v603, %v609
  %v614 = vmul.f32 %v584, 0.0
  %v615 = vmul.f32 %v586, 0.0
  %v616 = vadd.f32 %v612, %v614
  %v617 = vadd.f32 %v613, %v615
  %v618 = vpack.c.bf16 %v617, %v616
  %620 = vrot.lane.b32.xlu0 %v618, 64
  %v621 = vpop.permute.xlu0 %620
  %v630 = vunpack.c.l.b16 %v34
  %v631 = vunpack.c.h.b16 %v34
  %v632 = vunpack.c.l.b16 %v35
  %v633 = vunpack.c.h.b16 %v35
  %v634 = vunpack.c.l.b16 %v36
  %v635 = vunpack.c.h.b16 %v36
  %v636 = vunpack.c.l.b16 %v37
  %v637 = vunpack.c.h.b16 %v37
  %v638 = vunpack.c.l.b16 %v38
  %v639 = vunpack.c.h.b16 %v38
  %v640 = vunpack.c.l.b16 %v39
  %v641 = vunpack.c.h.b16 %v39
  %v642 = vunpack.c.l.b16 %v40
  %v643 = vunpack.c.h.b16 %v40
  %v644 = vunpack.c.l.b16 %v41
  %v645 = vunpack.c.h.b16 %v41
  %v646 = vpack.c.b16 %v632, %v630
  %v647 = vpack.c.b16 %v633, %v631
  %v648 = vpack.c.b16 %v636, %v634
  %v649 = vpack.c.b16 %v637, %v635
  %v650 = vpack.c.b16 %v640, %v638
  %v651 = vpack.c.b16 %v641, %v639
  %v652 = vpack.c.b16 %v644, %v642
  %v653 = vpack.c.b16 %v645, %v643
  %vm662 = vcmask 523264
  %v664 = vsel %vm662, %v621, 0
  %666 = vmatprep.subr.bf16.mxu0 %v647
  %667 = vmatpush1.bf16.msra.mxu0 %v646
  %668 = vmatprep.subr.bf16.mxu0 %v649
  %669 = vmatpush1.bf16.msra.mxu0 %v648
  %670 = vmatprep.subr.bf16.mxu0 %v651
  %671 = vmatpush1.bf16.msra.mxu0 %v650
  %672 = vmatprep.subr.bf16.mxu0 %v653
  %673 = vmatpush1.bf16.msra.mxu0 %v652
  %674 = vmatprep.subr.bf16.mxu0 0
  %675 = vmatpush1.bf16.msra.mxu0 0
  %676 = vmatprep.subr.bf16.mxu0 0
  %677 = vmatpush1.bf16.msra.mxu0 0
  %678 = vmatprep.subr.bf16.mxu0 0
  %679 = vmatpush1.bf16.msra.mxu0 0
  %680 = vmatprep.subr.bf16.mxu0 0
  %681 = vmatpush1.bf16.msra.mxu0 0
  %682 = vmatprep.subr.bf16.mxu0 0
  %683 = vmatpush1.bf16.msra.mxu0 0
  %684 = vmatprep.subr.bf16.mxu0 0
  %685 = vmatpush1.bf16.msra.mxu0 0
  %686 = vmatprep.subr.bf16.mxu0 0
  %687 = vmatpush1.bf16.msra.mxu0 0
  %688 = vmatprep.subr.bf16.mxu0 0
  %689 = vmatpush1.bf16.msra.mxu0 0
  %690 = vmatprep.subr.bf16.mxu0 0
  %691 = vmatpush1.bf16.msra.mxu0 0
  %692 = vmatprep.subr.bf16.mxu0 0
  %693 = vmatpush1.bf16.msra.mxu0 0
  %694 = vmatprep.subr.bf16.mxu0 0
  %695 = vmatpush1.bf16.msra.mxu0 0
  %696 = vmatprep.subr.bf16.mxu0 0
  %697 = vmatpush1.bf16.msra.mxu0 0
  %698 = vmatprep.mubr.bf16.mxu0 0
  %699 = vmatmul.mubr.bf16.gmra.mrb[0].mxu0 %v664
  %v700 = vpop.f32.mrb[0].mxu0
  %v701 = vadd.f32 0.0, %v700
  %v702 = vpop.f32.mrb[0].mxu0
  %v703 = vadd.f32 0.0, %v702
  %v704 = vpop.f32.mrb[0].mxu0
  %v705 = vadd.f32 0.0, %v704
  %v706 = vpop.f32.mrb[0].mxu0
  %v707 = vadd.f32 0.0, %v706
  %708 = vdwg.mxu0
  %v709 = vadd.f32 %v545, %v701
  %v710 = vadd.f32 %v549, %v705
  %v711 = vxor.u32 %v709, 2147483648
  %v712 = vxor.u32 %v710, 2147483648
  %v713 = vmul.f32 %v711, 1.442695
  %v714 = vpow.pop %v713
  %v715 = vmul.f32 %v712, 1.442695
  %v716 = vpow.pop %v715
  %v717 = vadd.f32 %v714, 1.0
  %v718 = vadd.f32 %v716, 1.0
  %v719 = vrcp.pop %v717
  %v720 = vmul.f32 1.0, %v719
  %v721 = vrcp.pop %v718
  %v722 = vmul.f32 1.0, %v721
  %v723 = vadd.f32 %v703, %v594
  %v724 = vadd.f32 %v707, %v594
  %v725 = vmul.f32 %v720, %v723
  %v726 = vmul.f32 %v722, %v724
  %v727 = vadd.f32 %v547, %v725
  %v728 = vadd.f32 %v551, %v726
  %v729 = vtanh.pop %v727
  %v730 = vtanh.pop %v728
  %v731 = vsub.f32 1.0, %v720
  %v732 = vsub.f32 1.0, %v722
  %735 = vrot.lane.b32.xlu0 %v729, 64
  %v736 = vpop.permute.xlu0 %735
  %737 = vrot.lane.b32.xlu0 %v730, 64
  %v738 = vpop.permute.xlu0 %737
  %v741 = vmul.f32 %v731, %v736
  %v742 = vmul.f32 %v732, %v738
  %v743 = vmul.f32 %v720, %v616
  %v744 = vmul.f32 %v722, %v617
  %v745 = vadd.f32 %v741, %v743
  %v746 = vadd.f32 %v742, %v744
  %v747 = vpack.c.bf16 %v746, %v745
  %749 = vrot.lane.b32.xlu0 %v747, 64
  %v750 = vpop.permute.xlu0 %749
  %v752 = vsel %vm662, %v750, 0
  %754 = vmatprep.subr.bf16.mxu0 %v647
  %755 = vmatpush1.bf16.msra.mxu0 %v646
  %756 = vmatprep.subr.bf16.mxu0 %v649
  %757 = vmatpush1.bf16.msra.mxu0 %v648
  %758 = vmatprep.subr.bf16.mxu0 %v651
  %759 = vmatpush1.bf16.msra.mxu0 %v650
  %760 = vmatprep.subr.bf16.mxu0 %v653
  %761 = vmatpush1.bf16.msra.mxu0 %v652
  %762 = vmatprep.subr.bf16.mxu0 0
  %763 = vmatpush1.bf16.msra.mxu0 0
  %764 = vmatprep.subr.bf16.mxu0 0
  %765 = vmatpush1.bf16.msra.mxu0 0
  %766 = vmatprep.subr.bf16.mxu0 0
  %767 = vmatpush1.bf16.msra.mxu0 0
  %768 = vmatprep.subr.bf16.mxu0 0
  %769 = vmatpush1.bf16.msra.mxu0 0
  %770 = vmatprep.subr.bf16.mxu0 0
  %771 = vmatpush1.bf16.msra.mxu0 0
  %772 = vmatprep.subr.bf16.mxu0 0
  %773 = vmatpush1.bf16.msra.mxu0 0
  %774 = vmatprep.subr.bf16.mxu0 0
  %775 = vmatpush1.bf16.msra.mxu0 0
  %776 = vmatprep.subr.bf16.mxu0 0
  %777 = vmatpush1.bf16.msra.mxu0 0
  %778 = vmatprep.subr.bf16.mxu0 0
  %779 = vmatpush1.bf16.msra.mxu0 0
  %780 = vmatprep.subr.bf16.mxu0 0
  %781 = vmatpush1.bf16.msra.mxu0 0
  %782 = vmatprep.subr.bf16.mxu0 0
  %783 = vmatpush1.bf16.msra.mxu0 0
  %784 = vmatprep.subr.bf16.mxu0 0
  %785 = vmatpush1.bf16.msra.mxu0 0
  %786 = vmatprep.mubr.bf16.mxu0 0
  %787 = vmatmul.mubr.bf16.gmra.mrb[0].mxu0 %v752
  %v788 = vpop.f32.mrb[0].mxu0
  %v789 = vadd.f32 0.0, %v788
  %v790 = vpop.f32.mrb[0].mxu0
  %v791 = vadd.f32 0.0, %v790
  %v792 = vpop.f32.mrb[0].mxu0
  %v793 = vadd.f32 0.0, %v792
  %v794 = vpop.f32.mrb[0].mxu0
  %v795 = vadd.f32 0.0, %v794
  %796 = vdwg.mxu0
  %v797 = vadd.f32 %v555, %v789
  %v798 = vadd.f32 %v559, %v793
  %v799 = vxor.u32 %v797, 2147483648
  %v800 = vxor.u32 %v798, 2147483648
  %v801 = vmul.f32 %v799, 1.442695
  %v802 = vpow.pop %v801
  %v803 = vmul.f32 %v800, 1.442695
  %v804 = vpow.pop %v803
  %v805 = vadd.f32 %v802, 1.0
  %v806 = vadd.f32 %v804, 1.0
  %v807 = vrcp.pop %v805
  %v808 = vmul.f32 1.0, %v807
  %v809 = vrcp.pop %v806
  %v810 = vmul.f32 1.0, %v809
  %v811 = vadd.f32 %v791, %v594
  %v812 = vadd.f32 %v795, %v594
  %v813 = vmul.f32 %v808, %v811
  %v814 = vmul.f32 %v810, %v812
  %v815 = vadd.f32 %v557, %v813
  %v816 = vadd.f32 %v561, %v814
  %v817 = vtanh.pop %v815
  %v818 = vtanh.pop %v816
  %v819 = vsub.f32 1.0, %v808
  %v820 = vsub.f32 1.0, %v810
  %823 = vrot.lane.b32.xlu0 %v817, 64
  %v824 = vpop.permute.xlu0 %823
  %825 = vrot.lane.b32.xlu0 %v818, 64
  %v826 = vpop.permute.xlu0 %825
  %v829 = vmul.f32 %v819, %v824
  %v830 = vmul.f32 %v820, %v826
  %v831 = vmul.f32 %v808, %v745
  %v832 = vmul.f32 %v810, %v746
  %v833 = vadd.f32 %v829, %v831
  %v834 = vadd.f32 %v830, %v832
  %v835 = vpack.c.bf16 %v834, %v833
  %837 = vrot.lane.b32.xlu0 %v835, 64
  %v838 = vpop.permute.xlu0 %837
  %v840 = vsel %vm662, %v838, 0
  %842 = vmatprep.subr.bf16.mxu0 %v647
  %843 = vmatpush1.bf16.msra.mxu0 %v646
  %844 = vmatprep.subr.bf16.mxu0 %v649
  %845 = vmatpush1.bf16.msra.mxu0 %v648
  %846 = vmatprep.subr.bf16.mxu0 %v651
  %847 = vmatpush1.bf16.msra.mxu0 %v650
  %848 = vmatprep.subr.bf16.mxu0 %v653
  %849 = vmatpush1.bf16.msra.mxu0 %v652
  %850 = vmatprep.subr.bf16.mxu0 0
  %851 = vmatpush1.bf16.msra.mxu0 0
  %852 = vmatprep.subr.bf16.mxu0 0
  %853 = vmatpush1.bf16.msra.mxu0 0
  %854 = vmatprep.subr.bf16.mxu0 0
  %855 = vmatpush1.bf16.msra.mxu0 0
  %856 = vmatprep.subr.bf16.mxu0 0
  %857 = vmatpush1.bf16.msra.mxu0 0
  %858 = vmatprep.subr.bf16.mxu0 0
  %859 = vmatpush1.bf16.msra.mxu0 0
  %860 = vmatprep.subr.bf16.mxu0 0
  %861 = vmatpush1.bf16.msra.mxu0 0
  %862 = vmatprep.subr.bf16.mxu0 0
  %863 = vmatpush1.bf16.msra.mxu0 0
  %864 = vmatprep.subr.bf16.mxu0 0
  %865 = vmatpush1.bf16.msra.mxu0 0
  %866 = vmatprep.subr.bf16.mxu0 0
  %867 = vmatpush1.bf16.msra.mxu0 0
  %868 = vmatprep.subr.bf16.mxu0 0
  %869 = vmatpush1.bf16.msra.mxu0 0
  %870 = vmatprep.subr.bf16.mxu0 0
  %871 = vmatpush1.bf16.msra.mxu0 0
  %872 = vmatprep.subr.bf16.mxu0 0
  %873 = vmatpush1.bf16.msra.mxu0 0
  %874 = vmatprep.mubr.bf16.mxu0 0
  %875 = vmatmul.mubr.bf16.gmra.mrb[0].mxu0 %v840
  %v876 = vpop.f32.mrb[0].mxu0
  %v877 = vadd.f32 0.0, %v876
  %v878 = vpop.f32.mrb[0].mxu0
  %v879 = vadd.f32 0.0, %v878
  %v880 = vpop.f32.mrb[0].mxu0
  %v881 = vadd.f32 0.0, %v880
  %v882 = vpop.f32.mrb[0].mxu0
  %v883 = vadd.f32 0.0, %v882
  %884 = vdwg.mxu0
  %v885 = vadd.f32 %v565, %v877
  %v886 = vadd.f32 %v569, %v881
  %v887 = vxor.u32 %v885, 2147483648
  %v888 = vxor.u32 %v886, 2147483648
  %v889 = vmul.f32 %v887, 1.442695
  %v890 = vpow.pop %v889
  %v891 = vmul.f32 %v888, 1.442695
  %v892 = vpow.pop %v891
  %v893 = vadd.f32 %v890, 1.0
  %v894 = vadd.f32 %v892, 1.0
  %v895 = vrcp.pop %v893
  %v896 = vmul.f32 1.0, %v895
  %v897 = vrcp.pop %v894
  %v898 = vmul.f32 1.0, %v897
  %v899 = vadd.f32 %v879, %v594
  %v900 = vadd.f32 %v883, %v594
  %v901 = vmul.f32 %v896, %v899
  %v902 = vmul.f32 %v898, %v900
  %v903 = vadd.f32 %v567, %v901
  %v904 = vadd.f32 %v571, %v902
  %v905 = vtanh.pop %v903
  %v906 = vtanh.pop %v904
  %v907 = vsub.f32 1.0, %v896
  %v908 = vsub.f32 1.0, %v898
  %911 = vrot.lane.b32.xlu0 %v905, 64
  %v912 = vpop.permute.xlu0 %911
  %913 = vrot.lane.b32.xlu0 %v906, 64
  %v914 = vpop.permute.xlu0 %913
  %v917 = vmul.f32 %v907, %v912
  %v918 = vmul.f32 %v908, %v914
  %v919 = vmul.f32 %v896, %v833
  %v920 = vmul.f32 %v898, %v834
  %v921 = vadd.f32 %v917, %v919
  %v922 = vadd.f32 %v918, %v920
  %v923 = vmax.f32 %v921, 0.0
  %v924 = vmax.f32 %v922, 0.0
  %v925 = vpack.c.bf16 %v924, %v923
  %v926 = vunpack.c.l.bf16 %v43
  %v927 = vlaneseq
  %v928 = vshrl.u32 %v927, 7
  %v929 = vsub.s32 0, %v928
  %v930 = vrot.slane %v926, %v929
  %932 = vrot.lane.b32.xlu0 %v925, 64
  %v933 = vpop.permute.xlu0 %932
  %v942 = vunpack.c.l.b16 %v46
  %v943 = vunpack.c.l.b16 %v47
  %v944 = vunpack.c.l.b16 %v48
  %v945 = vunpack.c.l.b16 %v49
  %v946 = vunpack.c.l.b16 %v50
  %v947 = vunpack.c.l.b16 %v51
  %v948 = vunpack.c.l.b16 %v52
  %v949 = vunpack.c.l.b16 %v53
  %v950 = vpack.c.b16 %v943, %v942
  %v951 = vpack.c.b16 %v945, %v944
  %v952 = vpack.c.b16 %v947, %v946
  %v953 = vpack.c.b16 %v949, %v948
  %v959 = vsel %vm662, %v933, 0
  %961 = vmatprep.subr.bf16.mxu0 0
  %962 = vmatpush1.bf16.msra.mxu0 %v950
  %963 = vmatprep.subr.bf16.mxu0 0
  %964 = vmatpush1.bf16.msra.mxu0 %v951
  %965 = vmatprep.subr.bf16.mxu0 0
  %966 = vmatpush1.bf16.msra.mxu0 %v952
  %967 = vmatprep.subr.bf16.mxu0 0
  %968 = vmatpush1.bf16.msra.mxu0 %v953
  %969 = vmatprep.subr.bf16.mxu0 0
  %970 = vmatpush1.bf16.msra.mxu0 0
  %971 = vmatprep.subr.bf16.mxu0 0
  %972 = vmatpush1.bf16.msra.mxu0 0
  %973 = vmatprep.subr.bf16.mxu0 0
  %974 = vmatpush1.bf16.msra.mxu0 0
  %975 = vmatprep.subr.bf16.mxu0 0
  %976 = vmatpush1.bf16.msra.mxu0 0
  %977 = vmatprep.subr.bf16.mxu0 0
  %978 = vmatpush1.bf16.msra.mxu0 0
  %979 = vmatprep.subr.bf16.mxu0 0
  %980 = vmatpush1.bf16.msra.mxu0 0
  %981 = vmatprep.subr.bf16.mxu0 0
  %982 = vmatpush1.bf16.msra.mxu0 0
  %983 = vmatprep.subr.bf16.mxu0 0
  %984 = vmatpush1.bf16.msra.mxu0 0
  %985 = vmatprep.subr.bf16.mxu0 0
  %986 = vmatpush1.bf16.msra.mxu0 0
  %987 = vmatprep.subr.bf16.mxu0 0
  %988 = vmatpush1.bf16.msra.mxu0 0
  %989 = vmatprep.subr.bf16.mxu0 0
  %990 = vmatpush1.bf16.msra.mxu0 0
  %991 = vmatprep.subr.bf16.mxu0 0
  %992 = vmatpush1.bf16.msra.mxu0 0
  %993 = vmatprep.mubr.bf16.mxu0 0
  %994 = vmatmul.mubr.bf16.gmra.mrb[0].mxu0 %v959
  %v995 = vpop.f32.mrb[0].mxu0
  %v996 = vadd.f32 %v930, %v995
  %v997 = vpop.f32.mrb[0].mxu0
  %v998 = vpop.f32.mrb[0].mxu0
  %v999 = vadd.f32 %v930, %v998
  %v1000 = vpop.f32.mrb[0].mxu0
  %1001 = vdwg.mxu0
  %v1002 = vpack.c.bf16 %v999, %v996
  %v1003 = vlaneseq
  %v1004 = vshrl.u32 %v1003, 7
  %v1005 = vsub.s32 1, %v1004
  %v1006 = vrot.slane %v926, %v1005
  %v1023 = vunpack.c.l.b16 %v54
  %v1024 = vunpack.c.l.b16 %v55
  %v1025 = vunpack.c.l.b16 %v56
  %v1026 = vunpack.c.l.b16 %v57
  %v1027 = vunpack.c.l.b16 %v58
  %v1028 = vunpack.c.l.b16 %v59
  %v1029 = vunpack.c.l.b16 %v60
  %v1030 = vunpack.c.l.b16 %v61
  %v1031 = vunpack.c.l.b16 %v62
  %v1032 = vunpack.c.l.b16 %v63
  %v1033 = vunpack.c.l.b16 %v64
  %v1034 = vunpack.c.l.b16 %v65
  %v1035 = vunpack.c.l.b16 %v66
  %v1036 = vunpack.c.l.b16 %v67
  %v1037 = vunpack.c.l.b16 %v68
  %v1038 = vunpack.c.l.b16 %v69
  %v1039 = vpack.c.b16 %v1024, %v1023
  %v1040 = vpack.c.b16 %v1026, %v1025
  %v1041 = vpack.c.b16 %v1028, %v1027
  %v1042 = vpack.c.b16 %v1030, %v1029
  %v1043 = vpack.c.b16 %v1032, %v1031
  %v1044 = vpack.c.b16 %v1034, %v1033
  %v1045 = vpack.c.b16 %v1036, %v1035
  %v1046 = vpack.c.b16 %v1038, %v1037
  %1055 = vmatprep.subr.bf16.mxu0 0
  %1056 = vmatpush1.bf16.msra.mxu0 %v1039
  %1057 = vmatprep.subr.bf16.mxu0 0
  %1058 = vmatpush1.bf16.msra.mxu0 %v1040
  %1059 = vmatprep.subr.bf16.mxu0 0
  %1060 = vmatpush1.bf16.msra.mxu0 %v1041
  %1061 = vmatprep.subr.bf16.mxu0 0
  %1062 = vmatpush1.bf16.msra.mxu0 %v1042
  %1063 = vmatprep.subr.bf16.mxu0 0
  %1064 = vmatpush1.bf16.msra.mxu0 %v1043
  %1065 = vmatprep.subr.bf16.mxu0 0
  %1066 = vmatpush1.bf16.msra.mxu0 %v1044
  %1067 = vmatprep.subr.bf16.mxu0 0
  %1068 = vmatpush1.bf16.msra.mxu0 %v1045
  %1069 = vmatprep.subr.bf16.mxu0 0
  %1070 = vmatpush1.bf16.msra.mxu0 %v1046
  %1071 = vmatprep.subr.bf16.mxu0 0
  %1072 = vmatpush1.bf16.msra.mxu0 0
  %1073 = vmatprep.subr.bf16.mxu0 0
  %1074 = vmatpush1.bf16.msra.mxu0 0
  %1075 = vmatprep.subr.bf16.mxu0 0
  %1076 = vmatpush1.bf16.msra.mxu0 0
  %1077 = vmatprep.subr.bf16.mxu0 0
  %1078 = vmatpush1.bf16.msra.mxu0 0
  %1079 = vmatprep.subr.bf16.mxu0 0
  %1080 = vmatpush1.bf16.msra.mxu0 0
  %1081 = vmatprep.subr.bf16.mxu0 0
  %1082 = vmatpush1.bf16.msra.mxu0 0
  %1083 = vmatprep.subr.bf16.mxu0 0
  %1084 = vmatpush1.bf16.msra.mxu0 0
  %1085 = vmatprep.subr.bf16.mxu0 0
  %1086 = vmatpush1.bf16.msra.mxu0 0
  %1087 = vmatprep.mubr.bf16.mxu0 0
  %1088 = vmatmul.mubr.bf16.gmra.mrb[0].mxu0 %v1002
  %v1089 = vpop.f32.mrb[0].mxu0
  %v1090 = vadd.f32 %v1006, %v1089
  %v1091 = vpop.f32.mrb[0].mxu0
  %v1092 = vpop.f32.mrb[0].mxu0
  %v1093 = vadd.f32 %v1006, %v1092
  %v1094 = vpop.f32.mrb[0].mxu0
  %1095 = vdwg.mxu0
  %v1096 = vxor.u32 %v1090, 2147483648
  %v1097 = vxor.u32 %v1093, 2147483648
  %v1098 = vmul.f32 %v1096, 1.442695
  %v1099 = vpow.pop %v1098
  %v1100 = vmul.f32 %v1097, 1.442695
  %v1101 = vpow.pop %v1100
  %v1102 = vadd.f32 %v1099, 1.0
  %v1103 = vadd.f32 %v1101, 1.0
  %v1104 = vrcp.pop %v1102
  %v1105 = vmul.f32 1.0, %v1104
  %v1106 = vrcp.pop %v1103
  %v1107 = vmul.f32 1.0, %v1106
  %v1108 = vpack.c.bf16 %v1107, %v1105
  %v1109 = vunpack.c.l.bf16 %v44
  %v1110 = vlaneseq
  %v1111 = vshrl.u32 %v1110, 7
  %v1112 = vsub.s32 2, %v1111
  %v1113 = vrot.slane %v1109, %v1112
  %v1130 = vunpack.c.l.b16 %v70
  %v1131 = vunpack.c.l.b16 %v71
  %v1132 = vunpack.c.l.b16 %v72
  %v1133 = vunpack.c.l.b16 %v73
  %v1134 = vunpack.c.l.b16 %v74
  %v1135 = vunpack.c.l.b16 %v75
  %v1136 = vunpack.c.l.b16 %v76
  %v1137 = vunpack.c.l.b16 %v77
  %v1138 = vunpack.c.l.b16 %v78
  %v1139 = vunpack.c.l.b16 %v79
  %v1140 = vunpack.c.l.b16 %v80
  %v1141 = vunpack.c.l.b16 %v81
  %v1142 = vunpack.c.l.b16 %v82
  %v1143 = vunpack.c.l.b16 %v83
  %v1144 = vunpack.c.l.b16 %v84
  %v1145 = vunpack.c.l.b16 %v85
  %v1146 = vpack.c.b16 %v1131, %v1130
  %v1147 = vpack.c.b16 %v1133, %v1132
  %v1148 = vpack.c.b16 %v1135, %v1134
  %v1149 = vpack.c.b16 %v1137, %v1136
  %v1150 = vpack.c.b16 %v1139, %v1138
  %v1151 = vpack.c.b16 %v1141, %v1140
  %v1152 = vpack.c.b16 %v1143, %v1142
  %v1153 = vpack.c.b16 %v1145, %v1144
  %1162 = vmatprep.subr.bf16.mxu0 0
  %1163 = vmatpush1.bf16.msra.mxu0 %v1146
  %1164 = vmatprep.subr.bf16.mxu0 0
  %1165 = vmatpush1.bf16.msra.mxu0 %v1147
  %1166 = vmatprep.subr.bf16.mxu0 0
  %1167 = vmatpush1.bf16.msra.mxu0 %v1148
  %1168 = vmatprep.subr.bf16.mxu0 0
  %1169 = vmatpush1.bf16.msra.mxu0 %v1149
  %1170 = vmatprep.subr.bf16.mxu0 0
  %1171 = vmatpush1.bf16.msra.mxu0 %v1150
  %1172 = vmatprep.subr.bf16.mxu0 0
  %1173 = vmatpush1.bf16.msra.mxu0 %v1151
  %1174 = vmatprep.subr.bf16.mxu0 0
  %1175 = vmatpush1.bf16.msra.mxu0 %v1152
  %1176 = vmatprep.subr.bf16.mxu0 0
  %1177 = vmatpush1.bf16.msra.mxu0 %v1153
  %1178 = vmatprep.subr.bf16.mxu0 0
  %1179 = vmatpush1.bf16.msra.mxu0 0
  %1180 = vmatprep.subr.bf16.mxu0 0
  %1181 = vmatpush1.bf16.msra.mxu0 0
  %1182 = vmatprep.subr.bf16.mxu0 0
  %1183 = vmatpush1.bf16.msra.mxu0 0
  %1184 = vmatprep.subr.bf16.mxu0 0
  %1185 = vmatpush1.bf16.msra.mxu0 0
  %1186 = vmatprep.subr.bf16.mxu0 0
  %1187 = vmatpush1.bf16.msra.mxu0 0
  %1188 = vmatprep.subr.bf16.mxu0 0
  %1189 = vmatpush1.bf16.msra.mxu0 0
  %1190 = vmatprep.subr.bf16.mxu0 0
  %1191 = vmatpush1.bf16.msra.mxu0 0
  %1192 = vmatprep.subr.bf16.mxu0 0
  %1193 = vmatpush1.bf16.msra.mxu0 0
  %1194 = vmatprep.mubr.bf16.mxu0 0
  %1195 = vmatmul.mubr.bf16.gmra.mrb[0].mxu0 %v1108
  %v1196 = vpop.f32.mrb[0].mxu0
  %v1197 = vadd.f32 %v1113, %v1196
  %v1198 = vpop.f32.mrb[0].mxu0
  %v1199 = vpop.f32.mrb[0].mxu0
  %v1200 = vadd.f32 %v1113, %v1199
  %v1201 = vpop.f32.mrb[0].mxu0
  %1202 = vdwg.mxu0
  %v1203 = vadd.f32 %v1105, %v1197
  %v1204 = vadd.f32 %v1107, %v1200
  %v1205 = vsel %vm662, %v1203, 0.0
  %1206 = vadd.xlane.f32.xlu0 %v1205
  %v1207 = vpop.xlane.xlu0 %1206
  %v1208 = vsel %vm662, %v1204, 0.0
  %1209 = vadd.xlane.f32.xlu0 %v1208
  %v1210 = vpop.xlane.xlu0 %1209
  %v1211 = vrcp.pop 64.0
  %v1212 = vmul.f32 %v1207, %v1211
  %v1213 = vmul.f32 %v1210, %v1211
  %v1214 = vsub.f32 %v1203, %v1212
  %v1215 = vsub.f32 %v1204, %v1213
  %v1216 = vmul.f32 %v1214, %v1214
  %v1217 = vmul.f32 %v1215, %v1215
  %v1218 = vsel %vm662, %v1216, 0.0
  %1219 = vadd.xlane.f32.xlu0 %v1218
  %v1220 = vpop.xlane.xlu0 %1219
  %v1221 = vsel %vm662, %v1217, 0.0
  %1222 = vadd.xlane.f32.xlu0 %v1221
  %v1223 = vpop.xlane.xlu0 %1222
  %v1224 = vmul.f32 %v1220, %v1211
  %v1225 = vmul.f32 %v1223, %v1211
  %v1226 = vadd.f32 %v1224, 1e-05
  %v1227 = vadd.f32 %v1225, 1e-05
  %v1228 = vrsqrt.pop %v1226
  %v1229 = vrsqrt.pop %v1227
  %v1230 = vmul.f32 %v1214, %v1228
  %v1231 = vmul.f32 %v1215, %v1229
  %v1232 = vlaneseq
  %v1233 = vshrl.u32 %v1232, 7
  %v1234 = vsub.s32 3, %v1233
  %v1235 = vrot.slane %v1109, %v1234
  %v1236 = vmul.f32 %v1230, %v1235
  %v1237 = vmul.f32 %v1231, %v1235
  %v1238 = vunpack.c.l.bf16 %v45
  %v1239 = vlaneseq
  %v1240 = vshrl.u32 %v1239, 7
  %v1241 = vsub.s32 4, %v1240
  %v1242 = vrot.slane %v1238, %v1241
  %v1243 = vadd.f32 %v1236, %v1242
  %v1244 = vadd.f32 %v1237, %v1242
  %1247 = vrot.lane.b32.xlu0 %v1243, 64
  %v1248 = vpop.permute.xlu0 %1247
  %1249 = vrot.lane.b32.xlu0 %v1244, 64
  %v1250 = vpop.permute.xlu0 %1249
  %v1253 = vmul.f32 %v1197, %v1248
  %v1254 = vmul.f32 %v1200, %v1250
  %v1255 = vxor.u32 %v1253, 2147483648
  %v1256 = vxor.u32 %v1254, 2147483648
  %v1257 = vmul.f32 %v1255, 1.442695
  %v1258 = vpow.pop %v1257
  %v1259 = vmul.f32 %v1256, 1.442695
  %v1260 = vpow.pop %v1259
  %v1261 = vadd.f32 %v1258, 1.0
  %v1262 = vadd.f32 %v1260, 1.0
  %v1263 = vrcp.pop %v1261
  %v1264 = vmul.f32 1.0, %v1263
  %v1265 = vrcp.pop %v1262
  %v1266 = vmul.f32 1.0, %v1265
  %v1267 = vpack.c.bf16 %v1266, %v1264
  %1269 = vrot.lane.b32.xlu0 %v1267, 64
  %v1270 = vpop.permute.xlu0 %1269
  %v1279 = vunpack.c.l.b16 %v86
  %v1280 = vunpack.c.l.b16 %v87
  %v1281 = vunpack.c.l.b16 %v88
  %v1282 = vunpack.c.l.b16 %v89
  %v1283 = vunpack.c.l.b16 %v90
  %v1284 = vunpack.c.l.b16 %v91
  %v1285 = vunpack.c.l.b16 %v92
  %v1286 = vunpack.c.l.b16 %v93
  %v1287 = vpack.c.b16 %v1280, %v1279
  %v1288 = vpack.c.b16 %v1282, %v1281
  %v1289 = vpack.c.b16 %v1284, %v1283
  %v1290 = vpack.c.b16 %v1286, %v1285
  %v1296 = vsel %vm662, %v1270, 0
  %1298 = vmatprep.subr.bf16.mxu0 0
  %1299 = vmatpush1.bf16.msra.mxu0 %v1287
  %1300 = vmatprep.subr.bf16.mxu0 0
  %1301 = vmatpush1.bf16.msra.mxu0 %v1288
  %1302 = vmatprep.subr.bf16.mxu0 0
  %1303 = vmatpush1.bf16.msra.mxu0 %v1289
  %1304 = vmatprep.subr.bf16.mxu0 0
  %1305 = vmatpush1.bf16.msra.mxu0 %v1290
  %1306 = vmatprep.subr.bf16.mxu0 0
  %1307 = vmatpush1.bf16.msra.mxu0 0
  %1308 = vmatprep.subr.bf16.mxu0 0
  %1309 = vmatpush1.bf16.msra.mxu0 0
  %1310 = vmatprep.subr.bf16.mxu0 0
  %1311 = vmatpush1.bf16.msra.mxu0 0
  %1312 = vmatprep.subr.bf16.mxu0 0
  %1313 = vmatpush1.bf16.msra.mxu0 0
  %1314 = vmatprep.subr.bf16.mxu0 0
  %1315 = vmatpush1.bf16.msra.mxu0 0
  %1316 = vmatprep.subr.bf16.mxu0 0
  %1317 = vmatpush1.bf16.msra.mxu0 0
  %1318 = vmatprep.subr.bf16.mxu0 0
  %1319 = vmatpush1.bf16.msra.mxu0 0
  %1320 = vmatprep.subr.bf16.mxu0 0
  %1321 = vmatpush1.bf16.msra.mxu0 0
  %1322 = vmatprep.subr.bf16.mxu0 0
  %1323 = vmatpush1.bf16.msra.mxu0 0
  %1324 = vmatprep.subr.bf16.mxu0 0
  %1325 = vmatpush1.bf16.msra.mxu0 0
  %1326 = vmatprep.subr.bf16.mxu0 0
  %1327 = vmatpush1.bf16.msra.mxu0 0
  %1328 = vmatprep.subr.bf16.mxu0 0
  %1329 = vmatpush1.bf16.msra.mxu0 0
  %1330 = vmatprep.mubr.bf16.mxu0 0
  %1331 = vmatmul.mubr.bf16.gmra.mrb[0].mxu0 %v1296
  %v1332 = vpop.f32.mrb[0].mxu0
  %v1333 = vadd.f32 0.0, %v1332
  %v1334 = vpop.f32.mrb[0].mxu0
  %v1335 = vpop.f32.mrb[0].mxu0
  %v1336 = vadd.f32 0.0, %v1335
  %v1337 = vpop.f32.mrb[0].mxu0
  %1338 = vdwg.mxu0
  %1341 = vrot.lane.b32.xlu0 %v1264, 64
  %v1342 = vpop.permute.xlu0 %1341
  %1343 = vrot.lane.b32.xlu0 %v1266, 64
  %v1344 = vpop.permute.xlu0 %1343
  %v1347 = vmul.f32 %v1333, %v1342
  %v1348 = vmul.f32 %v1336, %v1344
  %v1349 = vsel %vm662, %v1347, 0.0
  %1350 = vadd.xlane.f32.xlu0 %v1349
  %v1351 = vpop.xlane.xlu0 %1350
  %v1352 = vsel %vm662, %v1348, 0.0
  %1353 = vadd.xlane.f32.xlu0 %v1352
  %v1354 = vpop.xlane.xlu0 %1353
  %v1355 = vmul.f32 %v1351, 0.0005
  %v1356 = vmul.f32 %v1354, 0.0005
  %1359 = vrot.lane.b32.xlu0 %v1253, 64
  %v1360 = vpop.permute.xlu0 %1359
  %1361 = vrot.lane.b32.xlu0 %v1254, 64
  %v1362 = vpop.permute.xlu0 %1361
  %v1365 = vsel %vm662, %v1360, %v1355
  %v1366 = vsel %vm662, %v1362, %v1356
  %1367 = vst [vmem:[%s4] sm:$0xff] %v1365
  %1368 = vst [vmem:[%s4 + $0x8] sm:$0xff] %v1366
  // Predicated region
  $region18: #{safedrug_forward.1} parent=0 // pred_check
    _
  $region19: #{safedrug_forward.1} parent=0 // pred_check_branch
    %1370 = sbr.rel (0) target = $region21
  $region20: #{safedrug_forward.1} parent=0 // pred_region
    _
  $region21: #{safedrug_forward.1} parent=0 // pred_fallthru
    _
  // Predicated region
  $region22: #{safedrug_forward.1} parent=0 // pred_check
    _
  $region23: #{safedrug_forward.1} parent=0 // pred_check_branch
    %1372 = sbr.rel (0) target = $region25
  $region24: #{safedrug_forward.1} parent=0 // pred_region
    _
  $region25: #{safedrug_forward.1} parent=0 // pred_fallthru
    _

</llo_original>
